<compile_context>
chip_gen: v7x
topology: tpu7x:2x2x1
jax: 0.10.0
libtpu: 0.0.40
codegen_flags: <defaults>
</compile_context>

<pallas_src>
import functools

import jax
import jax.numpy as jnp
from jax import lax
from jax.experimental import pallas as pl
from jax.experimental.pallas import tpu as pltpu

LANE = 128
_VMEM_LIMIT = 32 * 1024 * 1024  # safe on v5e/v6e/v7x; blocks here are small


def _round_up(x, m):
    return (x + m - 1) // m * m


# ---------------------------------------------------------------------------
# Pallas kernels
# ---------------------------------------------------------------------------
def stem_kernel(w_ref, p_ref, b_ref, o_ref):
    """Transposed stem GEMM: y1^T = ReLU(w1^T @ patches^T + b1).

    w_ref: [C1, KKCp]  bf16   (16 x 32, resident)
    p_ref: [KKCp, TM]  bf16   (M = B*H1*W1 on the lane axis -> lane-dense)
    b_ref: [C1, 1]     f32
    o_ref: [C1, TM]    bf16
    """
    y = jnp.dot(w_ref[...], p_ref[...], preferred_element_type=jnp.float32)
    y = jnp.maximum(y + b_ref[...], 0.0)
    o_ref[...] = y.astype(o_ref.dtype)


def conv2_gap_head_kernel(z_ref, w2_ref, b2_ref, wh_ref, bh_ref, mask_ref,
                          o_ref, *, h2, w2):
    """Fused conv2 (3x3 s2, im2col folded in-kernel) + ReLU + GAP + linear head.

    One grid step = one batch element ("parallel" axis -> megacore on v7x).

    z_ref   : [1, 2, 2, Lp, C1] bf16  parity-split, spatially-flattened y1_pad
                                      z[0,r,c,i2*(W2+1)+j2,:] = y1_pad[2i2+r, 2j2+c, :]
    w2_ref  : [9, C1, C2]       bf16  per-tap conv2 weights
    b2_ref  : [1, C2]           f32
    wh_ref  : [C2, NPAD]        bf16  head weight, classes lane-padded to 128
    bh_ref  : [1, NPAD]         f32
    mask_ref: [LEN, 1]          f32   valid-position mask with 1/(H2*W2) folded in
    o_ref   : [1, 8, NPAD]      f32   logits row broadcast to 8 sublanes
    """
    wlen = w2 + 1
    length = h2 * wlen          # flattened window length (one junk col per row)
    acc = None
    for di in range(3):
        for dj in range(3):
            r, c = di % 2, dj % 2
            start = (di // 2) * wlen + (dj // 2)
            # Contiguous static slice of one parity plane == shifted window.
            slab = z_ref[0, r, c, start:start + length, :]        # [LEN, C1]
            wt = w2_ref[di * 3 + dj]                               # [C1, C2]
            part = jnp.dot(slab, wt, preferred_element_type=jnp.float32)
            acc = part if acc is None else acc + part
    y2 = jnp.maximum(acc + b2_ref[...], 0.0)                       # [LEN, C2] f32
    y2 = y2 * mask_ref[...]                                        # drop junk cols, *1/S2
    # Head applied before the spatial reduction (linear ops commute with the
    # GAP sum) so all dots are wide 2-D bf16 MXU matmuls.
    hm = jnp.dot(y2.astype(jnp.bfloat16), wh_ref[...],
                 preferred_element_type=jnp.float32)               # [LEN, NPAD]
    logits = jnp.sum(hm, axis=0, keepdims=True) + bh_ref[...]      # [1, NPAD]
    o_ref[0] = jnp.broadcast_to(logits, (o_ref.shape[1], o_ref.shape[2]))


# ---------------------------------------------------------------------------
# pallas_call wrappers
# ---------------------------------------------------------------------------
def _stem_pallas(w1t, p1t, b1col, tm):
    """w1t: [C1, KKCp] bf16, p1t: [KKCp, Mp] bf16 (Mp % tm == 0) -> [C1, Mp] bf16."""
    c1, kkc = w1t.shape
    _, mp = p1t.shape
    return pl.pallas_call(
        stem_kernel,
        out_shape=jax.ShapeDtypeStruct((c1, mp), jnp.bfloat16),
        grid_spec=pltpu.PrefetchScalarGridSpec(
            num_scalar_prefetch=0,
            grid=(mp // tm,),
            in_specs=[
                pl.BlockSpec((c1, kkc), lambda i: (0, 0)),
                pl.BlockSpec((kkc, tm), lambda i: (0, i)),
                pl.BlockSpec((c1, 1), lambda i: (0, 0)),
            ],
            out_specs=pl.BlockSpec((c1, tm), lambda i: (0, i)),
        ),
        compiler_params=pltpu.CompilerParams(
            dimension_semantics=("parallel",),     # megacore on v7x
            vmem_limit_bytes=_VMEM_LIMIT,
        ),
    )(w1t, p1t, b1col)


def _conv2_gap_head_pallas(z, w2s, b2row, wh, bhrow, mask, *, h2, w2):
    """z: [B, 2, 2, Lp, C1] bf16 -> [B, 8, NPAD] f32 (logits in row 0)."""
    bsz, _, _, lp, c1 = z.shape
    c2 = w2s.shape[2]
    npad = wh.shape[1]
    length = mask.shape[0]
    kernel = functools.partial(conv2_gap_head_kernel, h2=h2, w2=w2)
    return pl.pallas_call(
        kernel,
        out_shape=jax.ShapeDtypeStruct((bsz, 8, npad), jnp.float32),
        grid_spec=pltpu.PrefetchScalarGridSpec(
            num_scalar_prefetch=0,
            grid=(bsz,),
            in_specs=[
                pl.BlockSpec((1, 2, 2, lp, c1), lambda b: (b, 0, 0, 0, 0)),
                pl.BlockSpec((9, c1, c2), lambda b: (0, 0, 0)),
                pl.BlockSpec((1, c2), lambda b: (0, 0)),
                pl.BlockSpec((c2, npad), lambda b: (0, 0)),
                pl.BlockSpec((1, npad), lambda b: (0, 0)),
                pl.BlockSpec((length, 1), lambda b: (0, 0)),
            ],
            out_specs=pl.BlockSpec((1, 8, npad), lambda b: (b, 0, 0)),
        ),
        compiler_params=pltpu.CompilerParams(
            dimension_semantics=("parallel",),     # per-batch -> both TCs on v7x
            vmem_limit_bytes=_VMEM_LIMIT,
        ),
    )(z, w2s, b2row, wh, bhrow, mask)


# ---------------------------------------------------------------------------
# Plain-JAX glue
# ---------------------------------------------------------------------------
def im2col_nhwc(x_nhwc, k, stride, pad):
    x = jnp.pad(x_nhwc, ((0, 0), (pad, pad), (pad, pad), (0, 0)))
    B, Hp, Wp, C = x.shape
    Ho = (Hp - k) // stride + 1
    Wo = (Wp - k) // stride + 1
    cols = []
    for di in range(k):
        for dj in range(k):
            cols.append(
                x[:, di: di + stride * Ho: stride, dj: dj + stride * Wo: stride, :]
            )
    p = jnp.concatenate(cols, axis=-1)  # (B, Ho, Wo, k*k*C), order (di, dj, cin)
    return p.reshape(B, Ho * Wo, k * k * C), Ho, Wo


# ---------------------------------------------------------------------------
# Backbone: parameter init + forward
# ---------------------------------------------------------------------------
class TimmBackbonePallas:
    """Synthetic timm-style conv classifier. Params initialized deterministically."""

    def __init__(self, in_chans=3, num_classes=8, key=None):
        if key is None:
            key = jax.random.PRNGKey(0)
        k1, k2, k3, k4, k5, k6 = jax.random.split(key, 6)
        K = 3
        c1, c2 = 16, 32
        self.K, self.c1, self.c2 = K, c1, c2
        self.num_classes = num_classes

        # Reference-precision parameters (HWIO conv layout).
        self.w1 = (jax.random.normal(k1, (K, K, in_chans, c1), jnp.float32)
                   * (2.0 / (K * K * in_chans)) ** 0.5)
        self.b1 = 0.1 * jax.random.normal(k4, (1, c1), jnp.float32)
        self.w2 = (jax.random.normal(k2, (K, K, c1, c2), jnp.float32)
                   * (2.0 / (K * K * c1)) ** 0.5)
        self.b2 = 0.1 * jax.random.normal(k5, (1, c2), jnp.float32)
        self.wh = jax.random.normal(k3, (c2, num_classes), jnp.float32) * (1.0 / c2) ** 0.5
        self.bh = 0.1 * jax.random.normal(k6, (1, num_classes), jnp.float32)

        self.kkc1 = K * K * in_chans
        # Transposed stem: contraction lives on sublanes -> pad 27 -> 32 only.
        self.kkc1_pad = _round_up(self.kkc1, 32)
        self.ncls_pad = _round_up(num_classes, LANE)

        w1t = self.w1.reshape(self.kkc1, c1).T.astype(jnp.bfloat16)       # [16, 27]
        self.w1t_pad = (jnp.zeros((c1, self.kkc1_pad), jnp.bfloat16)
                        .at[:, :self.kkc1].set(w1t))
        self.b1_col = self.b1.reshape(c1, 1).astype(jnp.float32)

        # Conv2 weights as a per-tap stack [9, C1, C2] (tap t = di*3 + dj).
        self.w2_stack = self.w2.reshape(K * K, c1, c2).astype(jnp.bfloat16)
        self.b2_row = self.b2.reshape(1, c2).astype(jnp.float32)

        # Head: classes lane-padded to 128; weight kept in bf16.
        self.wh_pad = (jnp.zeros((c2, self.ncls_pad), jnp.bfloat16)
                       .at[:, :num_classes].set(self.wh.astype(jnp.bfloat16)))
        self.bh_row = (jnp.zeros((1, self.ncls_pad), jnp.float32)
                       .at[:, :num_classes].set(self.bh))

    def __call__(self, x_nchw):
        # Accept NCHW (PyTorch convention), compute in NHWC internally.
        x = jnp.transpose(x_nchw, (0, 2, 3, 1)).astype(jnp.float32)       # NHWC
        B = x.shape[0]
        K = self.K

        # ---- stem conv (3x3, s2, p1) + ReLU : transposed, M-lane-dense GEMM ----
        p1, H1, W1 = im2col_nhwc(x, K, stride=2, pad=1)     # (B, H1*W1, 27) f32
        M = B * H1 * W1
        p1t = p1.reshape(M, self.kkc1).astype(jnp.bfloat16).T              # [27, M]
        TM = min(2048, _round_up(M, LANE))                   # big lane tile (review)
        Mp = _round_up(M, TM)
        p1t_pad = (jnp.zeros((self.kkc1_pad, Mp), jnp.bfloat16)
                   .at[:self.kkc1, :M].set(p1t))
        y1t = _stem_pallas(self.w1t_pad, p1t_pad, self.b1_col, TM)         # [16, Mp] bf16

        # ---- stage 2: parity-split y1 in glue, im2col folded into the kernel ----
        y1 = (y1t[:, :M].reshape(self.c1, B, H1, W1)
              .transpose(1, 2, 3, 0))                                      # [B,H1,W1,16] bf16
        assert H1 % 2 == 0 and W1 % 2 == 0, "stage-2 parity split needs even H1/W1"
        H2, W2 = H1 // 2, W1 // 2
        y1p = jnp.pad(y1, ((0, 0), (1, 1), (1, 1), (0, 0)))                # conv pad=1
        z = (y1p.reshape(B, H2 + 1, 2, W2 + 1, 2, self.c1)
             .transpose(0, 2, 4, 1, 3, 5)                                  # (b, r, c, i2, j2, ch)
             .reshape(B, 2, 2, (H2 + 1) * (W2 + 1), self.c1))
        Lp = _round_up((H2 + 1) * (W2 + 1) + 1, 8)
        z = jnp.pad(z, ((0, 0), (0, 0), (0, 0),
                        (0, Lp - (H2 + 1) * (W2 + 1)), (0, 0)))

        wlen = W2 + 1
        length = H2 * wlen
        mask = (((jnp.arange(length) % wlen) < W2).astype(jnp.float32)
                / float(H2 * W2)).reshape(length, 1)                       # GAP scale folded in

        out = _conv2_gap_head_pallas(z, self.w2_stack, self.b2_row,
                                     self.wh_pad, self.bh_row, mask,
                                     h2=H2, w2=W2)                         # [B, 8, 128] f32
        return out[:, 0, :self.num_classes]


# ---------------------------------------------------------------------------
# Reference (pure jax.lax, same bf16 quantization points) for correctness check
# ---------------------------------------------------------------------------
def reference_forward(model, x_nchw):
    x = jnp.transpose(x_nchw, (0, 2, 3, 1)).astype(jnp.bfloat16)
    dn = ("NHWC", "HWIO", "NHWC")
    y1 = lax.conv_general_dilated(
        x, model.w1.astype(jnp.bfloat16), (2, 2), [(1, 1), (1, 1)],
        dimension_numbers=dn, preferred_element_type=jnp.float32,
    ) + model.b1.reshape(1, 1, 1, -1)
    y1 = jnp.maximum(y1, 0.0).astype(jnp.bfloat16)
    y2 = lax.conv_general_dilated(
        y1, model.w2.astype(jnp.bfloat16), (2, 2), [(1, 1), (1, 1)],
        dimension_numbers=dn, preferred_element_type=jnp.float32,
    ) + model.b2.reshape(1, 1, 1, -1)
    y2 = jnp.maximum(y2, 0.0)
    gap = jnp.mean(y2, axis=(1, 2))
    return gap @ model.wh + model.bh


if __name__ == "__main__":
    key = jax.random.PRNGKey(0)
    kx, kp = jax.random.split(key)
    # batch=2, channels=3 (timm default in_chans), 16x16 spatial
    x = jax.random.normal(kx, (2, 3, 16, 16), jnp.float32)

    model = TimmBackbonePallas(in_chans=3, num_classes=8, key=kp)
    fwd = jax.jit(model.__call__)

    out = jax.block_until_ready(fwd(x))
    ref = jax.block_until_ready(reference_forward(model, x))

    assert out.shape == (2, 8), out.shape
    # bf16 MXU inputs (f32 accumulation) -> tolerance relaxed vs f32-only check.
    assert jnp.allclose(out, ref, atol=2e-2, rtol=2e-2), (out, ref)

    print("KERNEL_OK")
</pallas_src>

<mosaic_0001>
module attributes {stable_mosaic.version = 11 : i64} {
  func.func @stem_kernel(%arg0: i32, %arg1: memref<16x32xbf16, #tpu.memory_space<vmem>>, %arg2: memref<32x128xbf16, #tpu.memory_space<vmem>>, %arg3: memref<16x1xf32, #tpu.memory_space<vmem>>, %arg4: memref<16x128xbf16, #tpu.memory_space<vmem>>) attributes {dimension_semantics = [#tpu.dimension_semantics<parallel>], iteration_bounds = array<i64: 1>, scalar_prefetch = 0 : i64, scratch_operands = 0 : i64, tpu.core_type = #tpu.core_type<tc>, window_params = [{pipeline_mode = #tpu.pipeline_mode<synchronous>, transform_indices = @transform_0, window_bounds = array<i64: 16, 32>}, {transform_indices = @transform_1, window_bounds = array<i64: 32, 128>}, {pipeline_mode = #tpu.pipeline_mode<synchronous>, transform_indices = @transform_2, window_bounds = array<i64: 16, 1>}, {transform_indices = @transform_3, window_bounds = array<i64: 16, 128>}]} {
    %c0 = arith.constant 0 : index
    %c0_0 = arith.constant 0 : index
    %0 = vector.load %arg1[%c0, %c0_0] : memref<16x32xbf16, #tpu.memory_space<vmem>>, vector<16x32xbf16>
    %c0_1 = arith.constant 0 : index
    %c0_2 = arith.constant 0 : index
    %1 = vector.load %arg2[%c0_1, %c0_2] : memref<32x128xbf16, #tpu.memory_space<vmem>>, vector<32x128xbf16>
    %cst = arith.constant dense<0.000000e+00> : vector<16x128xf32>
    %2 = tpu.matmul %0, %1, %cst {dimension_numbers = #tpu.dot_dimension_numbers<[1], [0], [0], [1], [0, 0, 1, 1], [], []>} : vector<16x32xbf16>, vector<32x128xbf16>, vector<16x128xf32> -> vector<16x128xf32>
    %c0_3 = arith.constant 0 : index
    %c0_4 = arith.constant 0 : index
    %3 = vector.load %arg3[%c0_3, %c0_4] : memref<16x1xf32, #tpu.memory_space<vmem>>, vector<16x1xf32>
    %4 = vector.broadcast %3 : vector<16x1xf32> to vector<16x128xf32>
    %5 = arith.addf %2, %4 : vector<16x128xf32>
    %cst_5 = arith.constant 0.000000e+00 : f32
    %6 = vector.broadcast %cst_5 : f32 to vector<16x128xf32>
    %7 = arith.maximumf %5, %6 : vector<16x128xf32>
    %8 = arith.truncf %7 : vector<16x128xf32> to vector<16x128xbf16>
    %c0_6 = arith.constant 0 : index
    %c0_7 = arith.constant 0 : index
    %9 = vector.load %arg4[%c0_6, %c0_7] : memref<16x128xbf16, #tpu.memory_space<vmem>>, vector<16x128xbf16>
    tpu.vector_store %arg4[%c0_6, %c0_7], %8 {strides = array<i32>} : memref<16x128xbf16, #tpu.memory_space<vmem>>, vector<16x128xbf16>,
    return
  }
  func.func @transform_0(%arg0: i32) -> (i32, i32) {
    %c0_i32 = arith.constant 0 : i32
    %c0_i32_0 = arith.constant 0 : i32
    %c0_i32_1 = arith.constant 0 : i32
    return %c0_i32, %c0_i32_0 : i32, i32
  }
  func.func @transform_1(%arg0: i32) -> (i32, i32) {
    %c0_i32 = arith.constant 0 : i32
    %c0_i32_0 = arith.constant 0 : i32
    return %c0_i32, %arg0 : i32, i32
  }
  func.func @transform_2(%arg0: i32) -> (i32, i32) {
    %c0_i32 = arith.constant 0 : i32
    %c0_i32_0 = arith.constant 0 : i32
    %c0_i32_1 = arith.constant 0 : i32
    return %c0_i32, %c0_i32_0 : i32, i32
  }
  func.func @transform_3(%arg0: i32) -> (i32, i32) {
    %c0_i32 = arith.constant 0 : i32
    %c0_i32_0 = arith.constant 0 : i32
    return %c0_i32, %arg0 : i32, i32
  }
}

module attributes {stable_mosaic.version = 11 : i64} {
  func.func @conv2_gap_head_kernel(%arg0: i32, %arg1: memref<1x2x2x32x16xbf16, #tpu.memory_space<vmem>>, %arg2: memref<9x16x32xbf16, #tpu.memory_space<vmem>>, %arg3: memref<1x32xf32, #tpu.memory_space<vmem>>, %arg4: memref<32x128xbf16, #tpu.memory_space<vmem>>, %arg5: memref<1x128xf32, #tpu.memory_space<vmem>>, %arg6: memref<20x1xf32, #tpu.memory_space<vmem>>, %arg7: memref<1x8x128xf32, #tpu.memory_space<vmem>>) attributes {dimension_semantics = [#tpu.dimension_semantics<parallel>], iteration_bounds = array<i64: 2>, scalar_prefetch = 0 : i64, scratch_operands = 0 : i64, tpu.core_type = #tpu.core_type<tc>, window_params = [{transform_indices = @transform_0, window_bounds = array<i64: 1, 2, 2, 32, 16>}, {pipeline_mode = #tpu.pipeline_mode<synchronous>, transform_indices = @transform_1, window_bounds = array<i64: 9, 16, 32>}, {pipeline_mode = #tpu.pipeline_mode<synchronous>, transform_indices = @transform_2, window_bounds = array<i64: 1, 32>}, {pipeline_mode = #tpu.pipeline_mode<synchronous>, transform_indices = @transform_3, window_bounds = array<i64: 32, 128>}, {pipeline_mode = #tpu.pipeline_mode<synchronous>, transform_indices = @transform_4, window_bounds = array<i64: 1, 128>}, {pipeline_mode = #tpu.pipeline_mode<synchronous>, transform_indices = @transform_5, window_bounds = array<i64: 20, 1>}, {transform_indices = @transform_6, window_bounds = array<i64: 1, 8, 128>}]} {
    %c0 = arith.constant 0 : index
    %c0_0 = arith.constant 0 : index
    %c0_1 = arith.constant 0 : index
    %c0_2 = arith.constant 0 : index
    %c0_3 = arith.constant 0 : index
    %0 = vector.load %arg1[%c0, %c0_0, %c0_1, %c0_2, %c0_3] : memref<1x2x2x32x16xbf16, #tpu.memory_space<vmem>>, vector<1x1x1x20x16xbf16>
    %1 = vector.shape_cast %0 : vector<1x1x1x20x16xbf16> to vector<20x16xbf16>
    %c0_4 = arith.constant 0 : index
    %c0_5 = arith.constant 0 : index
    %c0_6 = arith.constant 0 : index
    %2 = vector.load %arg2[%c0_4, %c0_5, %c0_6] : memref<9x16x32xbf16, #tpu.memory_space<vmem>>, vector<1x16x32xbf16>
    %3 = vector.shape_cast %2 : vector<1x16x32xbf16> to vector<16x32xbf16>
    %cst = arith.constant dense<0.000000e+00> : vector<20x32xf32>
    %4 = tpu.matmul %1, %3, %cst {dimension_numbers = #tpu.dot_dimension_numbers<[1], [0], [0], [1], [0, 0, 1, 1], [], []>} : vector<20x16xbf16>, vector<16x32xbf16>, vector<20x32xf32> -> vector<20x32xf32>
    %c0_7 = arith.constant 0 : index
    %c0_8 = arith.constant 0 : index
    %c1 = arith.constant 1 : index
    %c0_9 = arith.constant 0 : index
    %c0_10 = arith.constant 0 : index
    %5 = vector.load %arg1[%c0_7, %c0_8, %c1, %c0_9, %c0_10] : memref<1x2x2x32x16xbf16, #tpu.memory_space<vmem>>, vector<1x1x1x20x16xbf16>
    %6 = vector.shape_cast %5 : vector<1x1x1x20x16xbf16> to vector<20x16xbf16>
    %c1_11 = arith.constant 1 : index
    %c0_12 = arith.constant 0 : index
    %c0_13 = arith.constant 0 : index
    %7 = vector.load %arg2[%c1_11, %c0_12, %c0_13] : memref<9x16x32xbf16, #tpu.memory_space<vmem>>, vector<1x16x32xbf16>
    %8 = vector.shape_cast %7 : vector<1x16x32xbf16> to vector<16x32xbf16>
    %cst_14 = arith.constant dense<0.000000e+00> : vector<20x32xf32>
    %9 = tpu.matmul %6, %8, %cst_14 {dimension_numbers = #tpu.dot_dimension_numbers<[1], [0], [0], [1], [0, 0, 1, 1], [], []>} : vector<20x16xbf16>, vector<16x32xbf16>, vector<20x32xf32> -> vector<20x32xf32>
    %10 = arith.addf %4, %9 : vector<20x32xf32>
    %c0_15 = arith.constant 0 : index
    %c0_16 = arith.constant 0 : index
    %c0_17 = arith.constant 0 : index
    %c1_18 = arith.constant 1 : index
    %c0_19 = arith.constant 0 : index
    %11 = vector.load %arg1[%c0_15, %c0_16, %c0_17, %c1_18, %c0_19] : memref<1x2x2x32x16xbf16, #tpu.memory_space<vmem>>, vector<1x1x1x20x16xbf16>
    %12 = vector.shape_cast %11 : vector<1x1x1x20x16xbf16> to vector<20x16xbf16>
    %c2 = arith.constant 2 : index
    %c0_20 = arith.constant 0 : index
    %c0_21 = arith.constant 0 : index
    %13 = vector.load %arg2[%c2, %c0_20, %c0_21] : memref<9x16x32xbf16, #tpu.memory_space<vmem>>, vector<1x16x32xbf16>
    %14 = vector.shape_cast %13 : vector<1x16x32xbf16> to vector<16x32xbf16>
    %cst_22 = arith.constant dense<0.000000e+00> : vector<20x32xf32>
    %15 = tpu.matmul %12, %14, %cst_22 {dimension_numbers = #tpu.dot_dimension_numbers<[1], [0], [0], [1], [0, 0, 1, 1], [], []>} : vector<20x16xbf16>, vector<16x32xbf16>, vector<20x32xf32> -> vector<20x32xf32>
    %16 = arith.addf %10, %15 : vector<20x32xf32>
    %c0_23 = arith.constant 0 : index
    %c1_24 = arith.constant 1 : index
    %c0_25 = arith.constant 0 : index
    %c0_26 = arith.constant 0 : index
    %c0_27 = arith.constant 0 : index
    %17 = vector.load %arg1[%c0_23, %c1_24, %c0_25, %c0_26, %c0_27] : memref<1x2x2x32x16xbf16, #tpu.memory_space<vmem>>, vector<1x1x1x20x16xbf16>
    %18 = vector.shape_cast %17 : vector<1x1x1x20x16xbf16> to vector<20x16xbf16>
    %c3 = arith.constant 3 : index
    %c0_28 = arith.constant 0 : index
    %c0_29 = arith.constant 0 : index
    %19 = vector.load %arg2[%c3, %c0_28, %c0_29] : memref<9x16x32xbf16, #tpu.memory_space<vmem>>, vector<1x16x32xbf16>
    %20 = vector.shape_cast %19 : vector<1x16x32xbf16> to vector<16x32xbf16>
    %cst_30 = arith.constant dense<0.000000e+00> : vector<20x32xf32>
    %21 = tpu.matmul %18, %20, %cst_30 {dimension_numbers = #tpu.dot_dimension_numbers<[1], [0], [0], [1], [0, 0, 1, 1], [], []>} : vector<20x16xbf16>, vector<16x32xbf16>, vector<20x32xf32> -> vector<20x32xf32>
    %22 = arith.addf %16, %21 : vector<20x32xf32>
    %c0_31 = arith.constant 0 : index
    %c1_32 = arith.constant 1 : index
    %c1_33 = arith.constant 1 : index
    %c0_34 = arith.constant 0 : index
    %c0_35 = arith.constant 0 : index
    %23 = vector.load %arg1[%c0_31, %c1_32, %c1_33, %c0_34, %c0_35] : memref<1x2x2x32x16xbf16, #tpu.memory_space<vmem>>, vector<1x1x1x20x16xbf16>
    %24 = vector.shape_cast %23 : vector<1x1x1x20x16xbf16> to vector<20x16xbf16>
    %c4 = arith.constant 4 : index
    %c0_36 = arith.constant 0 : index
    %c0_37 = arith.constant 0 : index
    %25 = vector.load %arg2[%c4, %c0_36, %c0_37] : memref<9x16x32xbf16, #tpu.memory_space<vmem>>, vector<1x16x32xbf16>
    %26 = vector.shape_cast %25 : vector<1x16x32xbf16> to vector<16x32xbf16>
    %cst_38 = arith.constant dense<0.000000e+00> : vector<20x32xf32>
    %27 = tpu.matmul %24, %26, %cst_38 {dimension_numbers = #tpu.dot_dimension_numbers<[1], [0], [0], [1], [0, 0, 1, 1], [], []>} : vector<20x16xbf16>, vector<16x32xbf16>, vector<20x32xf32> -> vector<20x32xf32>
    %28 = arith.addf %22, %27 : vector<20x32xf32>
    %c0_39 = arith.constant 0 : index
    %c1_40 = arith.constant 1 : index
    %c0_41 = arith.constant 0 : index
    %c1_42 = arith.constant 1 : index
    %c0_43 = arith.constant 0 : index
    %29 = vector.load %arg1[%c0_39, %c1_40, %c0_41, %c1_42, %c0_43] : memref<1x2x2x32x16xbf16, #tpu.memory_space<vmem>>, vector<1x1x1x20x16xbf16>
    %30 = vector.shape_cast %29 : vector<1x1x1x20x16xbf16> to vector<20x16xbf16>
    %c5 = arith.constant 5 : index
    %c0_44 = arith.constant 0 : index
    %c0_45 = arith.constant 0 : index
    %31 = vector.load %arg2[%c5, %c0_44, %c0_45] : memref<9x16x32xbf16, #tpu.memory_space<vmem>>, vector<1x16x32xbf16>
    %32 = vector.shape_cast %31 : vector<1x16x32xbf16> to vector<16x32xbf16>
    %cst_46 = arith.constant dense<0.000000e+00> : vector<20x32xf32>
    %33 = tpu.matmul %30, %32, %cst_46 {dimension_numbers = #tpu.dot_dimension_numbers<[1], [0], [0], [1], [0, 0, 1, 1], [], []>} : vector<20x16xbf16>, vector<16x32xbf16>, vector<20x32xf32> -> vector<20x32xf32>
    %34 = arith.addf %28, %33 : vector<20x32xf32>
    %c0_47 = arith.constant 0 : index
    %c0_48 = arith.constant 0 : index
    %c0_49 = arith.constant 0 : index
    %c5_50 = arith.constant 5 : index
    %c0_51 = arith.constant 0 : index
    %35 = vector.load %arg1[%c0_47, %c0_48, %c0_49, %c5_50, %c0_51] : memref<1x2x2x32x16xbf16, #tpu.memory_space<vmem>>, vector<1x1x1x20x16xbf16>
    %36 = vector.shape_cast %35 : vector<1x1x1x20x16xbf16> to vector<20x16xbf16>
    %c6 = arith.constant 6 : index
    %c0_52 = arith.constant 0 : index
    %c0_53 = arith.constant 0 : index
    %37 = vector.load %arg2[%c6, %c0_52, %c0_53] : memref<9x16x32xbf16, #tpu.memory_space<vmem>>, vector<1x16x32xbf16>
    %38 = vector.shape_cast %37 : vector<1x16x32xbf16> to vector<16x32xbf16>
    %cst_54 = arith.constant dense<0.000000e+00> : vector<20x32xf32>
    %39 = tpu.matmul %36, %38, %cst_54 {dimension_numbers = #tpu.dot_dimension_numbers<[1], [0], [0], [1], [0, 0, 1, 1], [], []>} : vector<20x16xbf16>, vector<16x32xbf16>, vector<20x32xf32> -> vector<20x32xf32>
    %40 = arith.addf %34, %39 : vector<20x32xf32>
    %c0_55 = arith.constant 0 : index
    %c0_56 = arith.constant 0 : index
    %c1_57 = arith.constant 1 : index
    %c5_58 = arith.constant 5 : index
    %c0_59 = arith.constant 0 : index
    %41 = vector.load %arg1[%c0_55, %c0_56, %c1_57, %c5_58, %c0_59] : memref<1x2x2x32x16xbf16, #tpu.memory_space<vmem>>, vector<1x1x1x20x16xbf16>
    %42 = vector.shape_cast %41 : vector<1x1x1x20x16xbf16> to vector<20x16xbf16>
    %c7 = arith.constant 7 : index
    %c0_60 = arith.constant 0 : index
    %c0_61 = arith.constant 0 : index
    %43 = vector.load %arg2[%c7, %c0_60, %c0_61] : memref<9x16x32xbf16, #tpu.memory_space<vmem>>, vector<1x16x32xbf16>
    %44 = vector.shape_cast %43 : vector<1x16x32xbf16> to vector<16x32xbf16>
    %cst_62 = arith.constant dense<0.000000e+00> : vector<20x32xf32>
    %45 = tpu.matmul %42, %44, %cst_62 {dimension_numbers = #tpu.dot_dimension_numbers<[1], [0], [0], [1], [0, 0, 1, 1], [], []>} : vector<20x16xbf16>, vector<16x32xbf16>, vector<20x32xf32> -> vector<20x32xf32>
    %46 = arith.addf %40, %45 : vector<20x32xf32>
    %c0_63 = arith.constant 0 : index
    %c0_64 = arith.constant 0 : index
    %c0_65 = arith.constant 0 : index
    %c6_66 = arith.constant 6 : index
    %c0_67 = arith.constant 0 : index
    %47 = vector.load %arg1[%c0_63, %c0_64, %c0_65, %c6_66, %c0_67] : memref<1x2x2x32x16xbf16, #tpu.memory_space<vmem>>, vector<1x1x1x20x16xbf16>
    %48 = vector.shape_cast %47 : vector<1x1x1x20x16xbf16> to vector<20x16xbf16>
    %c8 = arith.constant 8 : index
    %c0_68 = arith.constant 0 : index
    %c0_69 = arith.constant 0 : index
    %49 = vector.load %arg2[%c8, %c0_68, %c0_69] : memref<9x16x32xbf16, #tpu.memory_space<vmem>>, vector<1x16x32xbf16>
    %50 = vector.shape_cast %49 : vector<1x16x32xbf16> to vector<16x32xbf16>
    %cst_70 = arith.constant dense<0.000000e+00> : vector<20x32xf32>
    %51 = tpu.matmul %48, %50, %cst_70 {dimension_numbers = #tpu.dot_dimension_numbers<[1], [0], [0], [1], [0, 0, 1, 1], [], []>} : vector<20x16xbf16>, vector<16x32xbf16>, vector<20x32xf32> -> vector<20x32xf32>
    %52 = arith.addf %46, %51 : vector<20x32xf32>
    %c0_71 = arith.constant 0 : index
    %c0_72 = arith.constant 0 : index
    %53 = vector.load %arg3[%c0_71, %c0_72] : memref<1x32xf32, #tpu.memory_space<vmem>>, vector<1x32xf32>
    %54 = vector.broadcast %53 : vector<1x32xf32> to vector<20x32xf32>
    %55 = arith.addf %52, %54 : vector<20x32xf32>
    %cst_73 = arith.constant 0.000000e+00 : f32
    %56 = vector.broadcast %cst_73 : f32 to vector<20x32xf32>
    %57 = arith.maximumf %55, %56 : vector<20x32xf32>
    %c0_74 = arith.constant 0 : index
    %c0_75 = arith.constant 0 : index
    %58 = vector.load %arg6[%c0_74, %c0_75] : memref<20x1xf32, #tpu.memory_space<vmem>>, vector<20x1xf32>
    %59 = vector.broadcast %58 : vector<20x1xf32> to vector<20x32xf32>
    %60 = arith.mulf %57, %59 : vector<20x32xf32>
    %61 = arith.truncf %60 : vector<20x32xf32> to vector<20x32xbf16>
    %c0_76 = arith.constant 0 : index
    %c0_77 = arith.constant 0 : index
    %62 = vector.load %arg4[%c0_76, %c0_77] : memref<32x128xbf16, #tpu.memory_space<vmem>>, vector<32x128xbf16>
    %cst_78 = arith.constant dense<0.000000e+00> : vector<20x128xf32>
    %63 = tpu.matmul %61, %62, %cst_78 {dimension_numbers = #tpu.dot_dimension_numbers<[1], [0], [0], [1], [0, 0, 1, 1], [], []>} : vector<20x32xbf16>, vector<32x128xbf16>, vector<20x128xf32> -> vector<20x128xf32>
    %cst_79 = arith.constant dense<0.000000e+00> : vector<128xf32>
    %64 = vector.multi_reduction <add>, %63, %cst_79 [0] : vector<20x128xf32> to vector<128xf32>
    %65 = vector.shape_cast %64 : vector<128xf32> to vector<1x128xf32>
    %c0_80 = arith.constant 0 : index
    %c0_81 = arith.constant 0 : index
    %66 = vector.load %arg5[%c0_80, %c0_81] : memref<1x128xf32, #tpu.memory_space<vmem>>, vector<1x128xf32>
    %67 = arith.addf %65, %66 : vector<1x128xf32>
    %68 = vector.shape_cast %67 : vector<1x128xf32> to vector<1x128xf32>
    %69 = vector.broadcast %68 : vector<1x128xf32> to vector<8x128xf32>
    %c0_82 = arith.constant 0 : index
    %c0_83 = arith.constant 0 : index
    %c0_84 = arith.constant 0 : index
    %70 = vector.load %arg7[%c0_82, %c0_83, %c0_84] : memref<1x8x128xf32, #tpu.memory_space<vmem>>, vector<1x8x128xf32>
    %71 = vector.shape_cast %70 : vector<1x8x128xf32> to vector<8x128xf32>
    %72 = vector.shape_cast %69 : vector<8x128xf32> to vector<1x8x128xf32>
    tpu.vector_store %arg7[%c0_82, %c0_83, %c0_84], %72 {strides = array<i32>} : memref<1x8x128xf32, #tpu.memory_space<vmem>>, vector<1x8x128xf32>,
    return
  }
  func.func @transform_0(%arg0: i32) -> (i32, i32, i32, i32, i32) {
    %c0_i32 = arith.constant 0 : i32
    %c0_i32_0 = arith.constant 0 : i32
    %c0_i32_1 = arith.constant 0 : i32
    %c0_i32_2 = arith.constant 0 : i32
    %c0_i32_3 = arith.constant 0 : i32
    return %arg0, %c0_i32, %c0_i32_0, %c0_i32_1, %c0_i32_2 : i32, i32, i32, i32, i32
  }
  func.func @transform_1(%arg0: i32) -> (i32, i32, i32) {
    %c0_i32 = arith.constant 0 : i32
    %c0_i32_0 = arith.constant 0 : i32
    %c0_i32_1 = arith.constant 0 : i32
    %c0_i32_2 = arith.constant 0 : i32
    return %c0_i32, %c0_i32_0, %c0_i32_1 : i32, i32, i32
  }
  func.func @transform_2(%arg0: i32) -> (i32, i32) {
    %c0_i32 = arith.constant 0 : i32
    %c0_i32_0 = arith.constant 0 : i32
    %c0_i32_1 = arith.constant 0 : i32
    return %c0_i32, %c0_i32_0 : i32, i32
  }
  func.func @transform_3(%arg0: i32) -> (i32, i32) {
    %c0_i32 = arith.constant 0 : i32
    %c0_i32_0 = arith.constant 0 : i32
    %c0_i32_1 = arith.constant 0 : i32
    return %c0_i32, %c0_i32_0 : i32, i32
  }
  func.func @transform_4(%arg0: i32) -> (i32, i32) {
    %c0_i32 = arith.constant 0 : i32
    %c0_i32_0 = arith.constant 0 : i32
    %c0_i32_1 = arith.constant 0 : i32
    return %c0_i32, %c0_i32_0 : i32, i32
  }
  func.func @transform_5(%arg0: i32) -> (i32, i32) {
    %c0_i32 = arith.constant 0 : i32
    %c0_i32_0 = arith.constant 0 : i32
    %c0_i32_1 = arith.constant 0 : i32
    return %c0_i32, %c0_i32_0 : i32, i32
  }
  func.func @transform_6(%arg0: i32) -> (i32, i32, i32) {
    %c0_i32 = arith.constant 0 : i32
    %c0_i32_0 = arith.constant 0 : i32
    %c0_i32_1 = arith.constant 0 : i32
    return %arg0, %c0_i32, %c0_i32_0 : i32, i32, i32
  }
}

</mosaic_0001>

<llo_original>
// kernel: a_call__.2
$region0: #{a_call__.2}
  #allocation0 [shape = 'u32[]', space=smem, size = 0x4, offset = 0x4, fixed_abs, tag = 'smem constant byte address 0x4 - core index']
  #allocation1 [shape = 'u32[144,128]{1,0:T(1,128)}', space=vmem, size = 0x12000, scoped, tag = 'internal scratch']
  %s0 = inlined_call_operand.vmem [shape: bf16[16,32], index: 0, kind: input, shape index: {}]
  %s1 = inlined_call_operand.vmem [shape: bf16[32,128], index: 1, kind: input, shape index: {}]
  %s2 = inlined_call_operand.vmem [shape: f32[16,1], index: 2, kind: input, shape index: {}]
  %s3 = inlined_call_operand.vmem [shape: bf16[16,128], index: 3, kind: output, shape index: {}]
  %s4 = sld [smem:[#allocation0]]
  $region22: #{a_call__.2} parent=0
    _
  %s6 = ssub.s32 1, %s4
  %s7 = scalar_select 0, %s6, %s4
  // Predicated region
  $region2: #{a_call__.2} parent=0 // pred_check
    _
  $region3: #{a_call__.2} parent=0 // pred_check_branch
    %9 = sbr.rel (0) target = $region5
  $region4: #{a_call__.2} parent=0 // pred_region
    _
  $region5: #{a_call__.2} parent=0 // pred_fallthru
    _
  // Predicated region
  $region6: #{a_call__.2} parent=0 // pred_check
    _
  $region7: #{a_call__.2} parent=0 // pred_check_branch
    %11 = sbr.rel (0) target = $region9
  $region8: #{a_call__.2} parent=0 // pred_region
    _
  $region9: #{a_call__.2} parent=0 // pred_fallthru
    _
  // Predicated region
  $region10: #{a_call__.2} parent=0 // pred_check
    _
  $region11: #{a_call__.2} parent=0 // pred_check_branch
    %13 = sbr.rel (0) target = $region13
  $region12: #{a_call__.2} parent=0 // pred_region
    _
  $region13: #{a_call__.2} parent=0 // pred_fallthru
    _
  %v15 = vld [vmem:[%s0] sm:$0xf]
  %v16 = vld [vmem:[%s0 + $0x4] sm:$0xf]
  %v17 = vld [vmem:[%s1] sm:$0xf]
  %v18 = vld [vmem:[%s1 + $0x4] sm:$0xf]
  %v19 = vld [vmem:[%s1 + $0x8] sm:$0xf]
  %v20 = vld [vmem:[%s1 + $0xc] sm:$0xf]
  %v21 = vld [vmem:[%s2] sm:$0xff]
  %v22 = vld [vmem:[%s2 + $0x8] sm:$0xff]
  %24 = vset.pattern.permute.xlu0 0
  %25 = vperm.xlu0 %24, %v21
  %v26 = vpop.permute.xlu0 %25
  %29 = vset.pattern.permute.xlu0 0
  %30 = vperm.xlu0 %29, %v22
  %v31 = vpop.permute.xlu0 %30
  %v35 = vunpack.c.l.b16 %v15
  %v36 = vunpack.c.l.b16 %v16
  %v37 = vpack.c.b16 %v36, %v35
  %v42 = vunpack.c.l.b16 %v17
  %v43 = vunpack.c.l.b16 %v18
  %v44 = vunpack.c.l.b16 %v19
  %v45 = vunpack.c.l.b16 %v20
  %v46 = vpack.c.b16 %v43, %v42
  %v47 = vpack.c.b16 %v45, %v44
  %vm50 = vcmask 261120
  %v52 = vsel %vm50, %v37, 0
  %54 = vmatprep.subr.bf16.mxu0 0
  %55 = vmatpush1.bf16.msra.mxu0 %v46
  %56 = vmatprep.subr.bf16.mxu0 0
  %57 = vmatpush1.bf16.msra.mxu0 %v47
  %58 = vmatprep.subr.bf16.mxu0 0
  %59 = vmatpush1.bf16.msra.mxu0 0
  %60 = vmatprep.subr.bf16.mxu0 0
  %61 = vmatpush1.bf16.msra.mxu0 0
  %62 = vmatprep.subr.bf16.mxu0 0
  %63 = vmatpush1.bf16.msra.mxu0 0
  %64 = vmatprep.subr.bf16.mxu0 0
  %65 = vmatpush1.bf16.msra.mxu0 0
  %66 = vmatprep.subr.bf16.mxu0 0
  %67 = vmatpush1.bf16.msra.mxu0 0
  %68 = vmatprep.subr.bf16.mxu0 0
  %69 = vmatpush1.bf16.msra.mxu0 0
  %70 = vmatprep.subr.bf16.mxu0 0
  %71 = vmatpush1.bf16.msra.mxu0 0
  %72 = vmatprep.subr.bf16.mxu0 0
  %73 = vmatpush1.bf16.msra.mxu0 0
  %74 = vmatprep.subr.bf16.mxu0 0
  %75 = vmatpush1.bf16.msra.mxu0 0
  %76 = vmatprep.subr.bf16.mxu0 0
  %77 = vmatpush1.bf16.msra.mxu0 0
  %78 = vmatprep.subr.bf16.mxu0 0
  %79 = vmatpush1.bf16.msra.mxu0 0
  %80 = vmatprep.subr.bf16.mxu0 0
  %81 = vmatpush1.bf16.msra.mxu0 0
  %82 = vmatprep.subr.bf16.mxu0 0
  %83 = vmatpush1.bf16.msra.mxu0 0
  %84 = vmatprep.subr.bf16.mxu0 0
  %85 = vmatpush1.bf16.msra.mxu0 0
  %86 = vmatprep.mubr.bf16.mxu0 0
  %87 = vmatmul.mubr.bf16.gmra.mrb[0].mxu0 %v52
  %v88 = vpop.f32.mrb[0].mxu0
  %v89 = vadd.f32 %v26, %v88
  %v90 = vpop.f32.mrb[0].mxu0
  %v91 = vpop.f32.mrb[0].mxu0
  %v92 = vadd.f32 %v31, %v91
  %v93 = vpop.f32.mrb[0].mxu0
  %94 = vdwg.mxu0
  %v95 = vmax.f32 %v89, 0.0
  %v96 = vmax.f32 %v92, 0.0
  %v97 = vpack.c.bf16 %v96, %v95
  %v99 = vunpack.c.l.b16 %v97
  %v100 = vunpack.c.h.b16 %v97
  %v101 = vpack.c.b16 %v99, %v99
  %v102 = vpack.c.b16 %v100, %v100
  %105 = vst [vmem:[%s3] sm:$0xf] %v101
  %106 = vst [vmem:[%s3 + $0x4] sm:$0xf] %v102
  // Predicated region
  $region14: #{a_call__.2} parent=0 // pred_check
    _
  $region15: #{a_call__.2} parent=0 // pred_check_branch
    %108 = sbr.rel (0) target = $region17
  $region16: #{a_call__.2} parent=0 // pred_region
    _
  $region17: #{a_call__.2} parent=0 // pred_fallthru
    _
  // Predicated region
  $region18: #{a_call__.2} parent=0 // pred_check
    _
  $region19: #{a_call__.2} parent=0 // pred_check_branch
    %110 = sbr.rel (0) target = $region21
  $region20: #{a_call__.2} parent=0 // pred_region
    _
  $region21: #{a_call__.2} parent=0 // pred_fallthru
    _

// kernel: a_call__.3
$region0: #{a_call__.3}
  #allocation0 [shape = 'u32[]', space=smem, size = 0x4, offset = 0x4, fixed_abs, tag = 'smem constant byte address 0x4 - core index']
  #allocation1 [shape = 'u32[144,128]{1,0:T(1,128)}', space=vmem, size = 0x12000, scoped, tag = 'internal scratch']
  %s0 = inlined_call_operand.vmem [shape: bf16[2,2,2,32,16], index: 0, kind: input, shape index: {}]
  %s1 = inlined_call_operand.vmem [shape: bf16[9,16,32], index: 1, kind: input, shape index: {}]
  %s2 = inlined_call_operand.vmem [shape: f32[1,32], index: 2, kind: input, shape index: {}]
  %s3 = inlined_call_operand.vmem [shape: bf16[32,128], index: 3, kind: input, shape index: {}]
  %s4 = inlined_call_operand.vmem [shape: f32[1,128], index: 4, kind: input, shape index: {}]
  %s5 = inlined_call_operand.vmem [shape: f32[20,1], index: 5, kind: input, shape index: {}]
  %s6 = inlined_call_operand.vmem [shape: f32[2,8,128], index: 6, kind: output, shape index: {}]
  %s7 = sld [smem:[#allocation0]]
  $region57: #{a_call__.3} parent=0
    _
  %s9 = ssub.s32 1, %s7
  %s10 = scalar_select 0, %s9, %s7
  loop: start=0, step=1, limit=4
  $region2: #{a_call__.3} parent=0 // loop_pre_header
    _
  $region3: #{a_call__.3} parent=0 // loop_header
    %s12 = sphi 0, %s16
    %p13 = scmp.ge.s32.totalorder %s12, 4
    %s22 = sphi 0, %s24
    %s25 = sphi 0, %s22
    %s26 = sphi 0, %s25
    %s42 = sphi 0, %s26
    %s46 = sphi 0, %s46
    %s48 = sphi 0, %s46
    %s49 = sphi 0, %s48
    %s63 = sphi 0, %s49
    %s67 = sphi 0, %s67
    %s69 = sphi 0, %s67
    %s70 = sphi 0, %s69
    %s84 = sphi 0, %s70
    %s88 = sphi 0, %s88
    %s90 = sphi 0, %s88
    %s91 = sphi 0, %s90
    %s105 = sphi 0, %s91
    %s109 = sphi 0, %s109
    %s111 = sphi 0, %s109
    %s112 = sphi 0, %s111
    %s126 = sphi 0, %s112
    %s130 = sphi 0, %s130
    %s132 = sphi 0, %s130
    %s133 = sphi 0, %s132
    %s147 = sphi 0, %s133
    %s153 = sphi 0, %s155
    %s156 = sphi 0, %s153
    %s157 = sphi 0, %s156
    %s173 = sphi 0, %s157
  $region4: #{a_call__.3} parent=0 // loop_header_branch
    %15 = sbr.rel (%p13) target = $region8
  $region5: #{a_call__.3} parent=0 // loop_body
    %s17 = ssub.s32 %s12, 1
    %s18 = ssub.s32 %s12, 2
    %s19 = sadd.s32 %s12, 1
    %s20 = ssub.s32 %s12, %s19
    %p21 = scmp.eq.s32.totalorder %s20, 0
    %s23 = sadd.s32 %s22, 1
    %s24 = scalar_select %p21, %s22, %s23
    %p27 = pneg %p21
    %p28 = scmp.eq.s32.totalorder %s12, 1
    %p29 = por %p27, %p28
    %p30 = scmp.ne.s32.totalorder %s22, %s25
    %p31 = scmp.eq.s32.totalorder %s12, 0
    %p32 = por %p30, %p31
    %p33 = scmp.ne.s32.totalorder %s22, %s25
    %p34 = scmp.eq.s32.totalorder %s17, 1
    %p35 = por %p33, %p34
    %p36 = scmp.ne.s32.totalorder %s25, %s26
    %p37 = scmp.eq.s32.totalorder %s17, 0
    %p38 = por %p36, %p37
    %p39 = scmp.ne.s32.totalorder %s25, %s26
    %p40 = scmp.eq.s32.totalorder %s18, 1
    %p41 = por %p39, %p40
    %p43 = scmp.ne.s32.totalorder %s26, %s42
    %p44 = scmp.eq.s32.totalorder %s18, 0
    %p45 = por %p43, %p44
    %s47 = sadd.s32 %s46, 1
    %p50 = scmp.eq.s32.totalorder %s12, 1
    %p51 = scmp.ne.s32.totalorder %s46, %s48
    %p52 = scmp.eq.s32.totalorder %s12, 0
    %p53 = por %p51, %p52
    %p54 = scmp.ne.s32.totalorder %s46, %s48
    %p55 = scmp.eq.s32.totalorder %s17, 1
    %p56 = por %p54, %p55
    %p57 = scmp.ne.s32.totalorder %s48, %s49
    %p58 = scmp.eq.s32.totalorder %s17, 0
    %p59 = por %p57, %p58
    %p60 = scmp.ne.s32.totalorder %s48, %s49
    %p61 = scmp.eq.s32.totalorder %s18, 1
    %p62 = por %p60, %p61
    %p64 = scmp.ne.s32.totalorder %s49, %s63
    %p65 = scmp.eq.s32.totalorder %s18, 0
    %p66 = por %p64, %p65
    %s68 = sadd.s32 %s67, 1
    %p71 = scmp.eq.s32.totalorder %s12, 1
    %p72 = scmp.ne.s32.totalorder %s67, %s69
    %p73 = scmp.eq.s32.totalorder %s12, 0
    %p74 = por %p72, %p73
    %p75 = scmp.ne.s32.totalorder %s67, %s69
    %p76 = scmp.eq.s32.totalorder %s17, 1
    %p77 = por %p75, %p76
    %p78 = scmp.ne.s32.totalorder %s69, %s70
    %p79 = scmp.eq.s32.totalorder %s17, 0
    %p80 = por %p78, %p79
    %p81 = scmp.ne.s32.totalorder %s69, %s70
    %p82 = scmp.eq.s32.totalorder %s18, 1
    %p83 = por %p81, %p82
    %p85 = scmp.ne.s32.totalorder %s70, %s84
    %p86 = scmp.eq.s32.totalorder %s18, 0
    %p87 = por %p85, %p86
    %s89 = sadd.s32 %s88, 1
    %p92 = scmp.eq.s32.totalorder %s12, 1
    %p93 = scmp.ne.s32.totalorder %s88, %s90
    %p94 = scmp.eq.s32.totalorder %s12, 0
    %p95 = por %p93, %p94
    %p96 = scmp.ne.s32.totalorder %s88, %s90
    %p97 = scmp.eq.s32.totalorder %s17, 1
    %p98 = por %p96, %p97
    %p99 = scmp.ne.s32.totalorder %s90, %s91
    %p100 = scmp.eq.s32.totalorder %s17, 0
    %p101 = por %p99, %p100
    %p102 = scmp.ne.s32.totalorder %s90, %s91
    %p103 = scmp.eq.s32.totalorder %s18, 1
    %p104 = por %p102, %p103
    %p106 = scmp.ne.s32.totalorder %s91, %s105
    %p107 = scmp.eq.s32.totalorder %s18, 0
    %p108 = por %p106, %p107
    %s110 = sadd.s32 %s109, 1
    %p113 = scmp.eq.s32.totalorder %s12, 1
    %p114 = scmp.ne.s32.totalorder %s109, %s111
    %p115 = scmp.eq.s32.totalorder %s12, 0
    %p116 = por %p114, %p115
    %p117 = scmp.ne.s32.totalorder %s109, %s111
    %p118 = scmp.eq.s32.totalorder %s17, 1
    %p119 = por %p117, %p118
    %p120 = scmp.ne.s32.totalorder %s111, %s112
    %p121 = scmp.eq.s32.totalorder %s17, 0
    %p122 = por %p120, %p121
    %p123 = scmp.ne.s32.totalorder %s111, %s112
    %p124 = scmp.eq.s32.totalorder %s18, 1
    %p125 = por %p123, %p124
    %p127 = scmp.ne.s32.totalorder %s112, %s126
    %p128 = scmp.eq.s32.totalorder %s18, 0
    %p129 = por %p127, %p128
    %s131 = sadd.s32 %s130, 1
    %p134 = scmp.eq.s32.totalorder %s12, 1
    %p135 = scmp.ne.s32.totalorder %s130, %s132
    %p136 = scmp.eq.s32.totalorder %s12, 0
    %p137 = por %p135, %p136
    %p138 = scmp.ne.s32.totalorder %s130, %s132
    %p139 = scmp.eq.s32.totalorder %s17, 1
    %p140 = por %p138, %p139
    %p141 = scmp.ne.s32.totalorder %s132, %s133
    %p142 = scmp.eq.s32.totalorder %s17, 0
    %p143 = por %p141, %p142
    %p144 = scmp.ne.s32.totalorder %s132, %s133
    %p145 = scmp.eq.s32.totalorder %s18, 1
    %p146 = por %p144, %p145
    %p148 = scmp.ne.s32.totalorder %s133, %s147
    %p149 = scmp.eq.s32.totalorder %s18, 0
    %p150 = por %p148, %p149
    %s151 = ssub.s32 %s12, %s19
    %p152 = scmp.eq.s32.totalorder %s151, 0
    %s154 = sadd.s32 %s153, 1
    %s155 = scalar_select %p152, %s153, %s154
    %p158 = pneg %p152
    %p159 = scmp.eq.s32.totalorder %s12, 1
    %p160 = por %p158, %p159
    %p161 = scmp.ne.s32.totalorder %s153, %s156
    %p162 = scmp.eq.s32.totalorder %s12, 0
    %p163 = por %p161, %p162
    %p164 = scmp.ne.s32.totalorder %s153, %s156
    %p165 = scmp.eq.s32.totalorder %s17, 1
    %p166 = por %p164, %p165
    %p167 = scmp.ne.s32.totalorder %s156, %s157
    %p168 = scmp.eq.s32.totalorder %s17, 0
    %p169 = por %p167, %p168
    %p170 = scmp.ne.s32.totalorder %s156, %s157
    %p171 = scmp.eq.s32.totalorder %s18, 1
    %p172 = por %p170, %p171
    %p174 = scmp.ne.s32.totalorder %s157, %s173
    %p175 = scmp.eq.s32.totalorder %s18, 0
    %p176 = por %p174, %p175
    %p177 = scmp.le.s32.totalorder 1, %s12
    %p178 = scmp.lt.s32.totalorder %s12, 3
    %p179 = pnand %p177, %p178
    %p180 = pneg %p179
    // Predicated region
    $region9: #{a_call__.3} parent=5 // pred_check
      _
    $region10: #{a_call__.3} parent=5 // pred_check_branch
      %182 = sbr.rel (%p179) target = $region12
    $region11: #{a_call__.3} parent=5 // pred_region
      %s183 = ssub.s32 %s12, 1
      // Predicated region
      $region13: #{a_call__.3} parent=11 // pred_check
        %p184 = pneg %p59
      $region14: #{a_call__.3} parent=11 // pred_check_branch
        %186 = sbr.rel (%p184) target = $region16
      $region15: #{a_call__.3} parent=11 // pred_region
        _
      $region16: #{a_call__.3} parent=11 // pred_fallthru
        _
      // Predicated region
      $region17: #{a_call__.3} parent=11 // pred_check
        %p187 = pneg %p80
      $region18: #{a_call__.3} parent=11 // pred_check_branch
        %189 = sbr.rel (%p187) target = $region20
      $region19: #{a_call__.3} parent=11 // pred_region
        _
      $region20: #{a_call__.3} parent=11 // pred_fallthru
        _
      // Predicated region
      $region21: #{a_call__.3} parent=11 // pred_check
        %p190 = pneg %p101
      $region22: #{a_call__.3} parent=11 // pred_check_branch
        %192 = sbr.rel (%p190) target = $region24
      $region23: #{a_call__.3} parent=11 // pred_region
        _
      $region24: #{a_call__.3} parent=11 // pred_fallthru
        _
      // Predicated region
      $region25: #{a_call__.3} parent=11 // pred_check
        %p193 = pneg %p122
      $region26: #{a_call__.3} parent=11 // pred_check_branch
        %195 = sbr.rel (%p193) target = $region28
      $region27: #{a_call__.3} parent=11 // pred_region
        _
      $region28: #{a_call__.3} parent=11 // pred_fallthru
        _
      // Predicated region
      $region29: #{a_call__.3} parent=11 // pred_check
        %p196 = pneg %p143
      $region30: #{a_call__.3} parent=11 // pred_check_branch
        %198 = sbr.rel (%p196) target = $region32
      $region31: #{a_call__.3} parent=11 // pred_region
        _
      $region32: #{a_call__.3} parent=11 // pred_fallthru
        _
    $region12: #{a_call__.3} parent=5 // pred_fallthru
      _
    %p199 = scmp.lt.s32.totalorder %s12, 2
    // Predicated region
    $region33: #{a_call__.3} parent=5 // pred_check
      %p200 = pneg %p199
    $region34: #{a_call__.3} parent=5 // pred_check_branch
      %202 = sbr.rel (%p200) target = $region36
    $region35: #{a_call__.3} parent=5 // pred_region
      // Predicated region
      $region37: #{a_call__.3} parent=35 // pred_check
        %p203 = pneg %p32
      $region38: #{a_call__.3} parent=35 // pred_check_branch
        %205 = sbr.rel (%p203) target = $region40
      $region39: #{a_call__.3} parent=35 // pred_region
        %p206 = scmp.lt.s32.totalorder %s12, 1
        %s207 = scalar_select %p206, %s12, 1
        %s208 = smul.addr %s207, 16
        %s209 = smul.addr %s208, 4
        %s210 = scalar_lea.vmem %s0, %s209
      $region40: #{a_call__.3} parent=35 // pred_fallthru
        _
    $region36: #{a_call__.3} parent=5 // pred_fallthru
      _
    %p211 = scmp.le.s32.totalorder 1, %s12
    %p212 = scmp.lt.s32.totalorder %s12, 3
    %p213 = pnand %p211, %p212
    %p214 = pneg %p213
    // Predicated region
    $region41: #{a_call__.3} parent=5 // pred_check
      _
    $region42: #{a_call__.3} parent=5 // pred_check_branch
      %216 = sbr.rel (%p213) target = $region44
    $region43: #{a_call__.3} parent=5 // pred_region
      %s217 = ssub.s32 %s12, 1
      %p218 = scmp.lt.s32.totalorder %s17, 1
      %s219 = scalar_select %p218, %s17, 1
      %s220 = smul.addr %s219, 16
      %s221 = smul.addr %s220, 4
      %s222 = scalar_lea.vmem %s0, %s221
      %p223 = pneg %p38
      %p224 = pneg %p35
      %p225 = pneg %p59
      %p226 = pneg %p56
      %p227 = pneg %p80
      %p228 = pneg %p77
      %p229 = pneg %p101
      %p230 = pneg %p98
      %p231 = pneg %p122
      %p232 = pneg %p119
      %p233 = pneg %p143
      %p234 = pneg %p140
      %p235 = pneg %p169
      %p236 = pneg %p166
      %p237 = scmp.lt.s32.totalorder %s17, 1
      %s238 = scalar_select %p237, %s17, 1
      %s239 = smul.addr %s238, 8
      %s240 = scalar_lea.vmem %s6, %s239
      %p241 = scmp.lt.s32.totalorder %s17, 1
      %s242 = scalar_select %p241, %s17, 1
      %s243 = smul.addr %s242, 16
      %s244 = smul.addr %s243, 4
      %s245 = scalar_lea.vmem %s0, %s244
      %p246 = scmp.lt.s32.totalorder %s17, 1
      %s247 = scalar_select %p246, %s17, 1
      %s248 = smul.addr %s247, 8
      %s249 = scalar_lea.vmem %s6, %s248
      %v251 = vld [vmem:[%s245] sm:$0xf]
      %v252 = vld [vmem:[%s245 + $0x4] sm:$0xf]
      %v253 = vld [vmem:[%s245 + $0x8] sm:$0x3]
      %v254 = vld [vmem:[%s1] sm:$0xf]
      %v255 = vld [vmem:[%s1 + $0x4] sm:$0xf]
      %s256 = scalar_lea.vmem %s245, 16
      %v257 = vld [vmem:[%s256] sm:$0xf]
      %v258 = vld [vmem:[%s256 + $0x4] sm:$0xf]
      %v259 = vld [vmem:[%s256 + $0x8] sm:$0x3]
      %s260 = scalar_lea.vmem %s1, 8
      %v261 = vld [vmem:[%s260] sm:$0xf]
      %v262 = vld [vmem:[%s260 + $0x4] sm:$0xf]
      %v266 = vunpack.c.l.b16 %v257
      %v267 = vunpack.c.l.b16 %v258
      %v268 = vunpack.c.l.b16 %v259
      %v269 = vpack.c.b16 %v267, %v266
      %v270 = vpack.c.b16 %v268, %v268
      %v273 = vunpack.c.l.b16 %v261
      %v274 = vunpack.c.l.b16 %v262
      %v275 = vpack.c.b16 %v274, %v273
      %vm277 = vcmask 130048
      %v279 = vsel %vm277, %v269, 0
      %v282 = vsel %vm277, %v270, 0
      %284 = vmatprep.subr.bf16.mxu0 0
      %285 = vmatpush1.bf16.msra.mxu0 %v275
      %286 = vmatprep.subr.bf16.mxu0 0
      %287 = vmatpush1.bf16.msra.mxu0 0
      %288 = vmatprep.subr.bf16.mxu0 0
      %289 = vmatpush1.bf16.msra.mxu0 0
      %290 = vmatprep.subr.bf16.mxu0 0
      %291 = vmatpush1.bf16.msra.mxu0 0
      %292 = vmatprep.subr.bf16.mxu0 0
      %293 = vmatpush1.bf16.msra.mxu0 0
      %294 = vmatprep.subr.bf16.mxu0 0
      %295 = vmatpush1.bf16.msra.mxu0 0
      %296 = vmatprep.subr.bf16.mxu0 0
      %297 = vmatpush1.bf16.msra.mxu0 0
      %298 = vmatprep.subr.bf16.mxu0 0
      %299 = vmatpush1.bf16.msra.mxu0 0
      %300 = vmatprep.subr.bf16.mxu0 0
      %301 = vmatpush1.bf16.msra.mxu0 0
      %302 = vmatprep.subr.bf16.mxu0 0
      %303 = vmatpush1.bf16.msra.mxu0 0
      %304 = vmatprep.subr.bf16.mxu0 0
      %305 = vmatpush1.bf16.msra.mxu0 0
      %306 = vmatprep.subr.bf16.mxu0 0
      %307 = vmatpush1.bf16.msra.mxu0 0
      %308 = vmatprep.subr.bf16.mxu0 0
      %309 = vmatpush1.bf16.msra.mxu0 0
      %310 = vmatprep.subr.bf16.mxu0 0
      %311 = vmatpush1.bf16.msra.mxu0 0
      %312 = vmatprep.subr.bf16.mxu0 0
      %313 = vmatpush1.bf16.msra.mxu0 0
      %314 = vmatprep.subr.bf16.mxu0 0
      %315 = vmatpush1.bf16.msra.mxu0 0
      %316 = vmatprep.mubr.bf16.mxu0 0
      %317 = vmatmul.mubr.bf16.gmra.mrb[0].mxu0 %v279
      %v318 = vpop.f32.mrb[0].mxu0
      %v319 = vadd.f32 0.0, %v318
      %v320 = vpop.f32.mrb[0].mxu0
      %v321 = vpop.f32.mrb[0].mxu0
      %v322 = vadd.f32 0.0, %v321
      %v323 = vpop.f32.mrb[0].mxu0
      %324 = vmatprep.mubr.bf16.mxu0 0
      %325 = vmatmul.mubr.bf16.gmra.mrb[0].mxu0 %v282
      %v326 = vpop.f32.mrb[0].mxu0
      %v327 = vadd.f32 0.0, %v326
      %v328 = vpop.f32.mrb[0].mxu0
      %v329 = vpop.f32.mrb[0].mxu0
      %v330 = vpop.f32.mrb[0].mxu0
      %331 = vdwg.mxu0
      %v335 = vunpack.c.l.b16 %v251
      %v336 = vunpack.c.l.b16 %v252
      %v337 = vunpack.c.l.b16 %v253
      %v338 = vpack.c.b16 %v336, %v335
      %v339 = vpack.c.b16 %v337, %v337
      %v342 = vunpack.c.l.b16 %v254
      %v343 = vunpack.c.l.b16 %v255
      %v344 = vpack.c.b16 %v343, %v342
      %v347 = vsel %vm277, %v338, 0
      %v350 = vsel %vm277, %v339, 0
      %352 = vmatprep.subr.bf16.mxu0 0
      %353 = vmatpush1.bf16.msra.mxu0 %v344
      %354 = vmatprep.subr.bf16.mxu0 0
      %355 = vmatpush1.bf16.msra.mxu0 0
      %356 = vmatprep.subr.bf16.mxu0 0
      %357 = vmatpush1.bf16.msra.mxu0 0
      %358 = vmatprep.subr.bf16.mxu0 0
      %359 = vmatpush1.bf16.msra.mxu0 0
      %360 = vmatprep.subr.bf16.mxu0 0
      %361 = vmatpush1.bf16.msra.mxu0 0
      %362 = vmatprep.subr.bf16.mxu0 0
      %363 = vmatpush1.bf16.msra.mxu0 0
      %364 = vmatprep.subr.bf16.mxu0 0
      %365 = vmatpush1.bf16.msra.mxu0 0
      %366 = vmatprep.subr.bf16.mxu0 0
      %367 = vmatpush1.bf16.msra.mxu0 0
      %368 = vmatprep.subr.bf16.mxu0 0
      %369 = vmatpush1.bf16.msra.mxu0 0
      %370 = vmatprep.subr.bf16.mxu0 0
      %371 = vmatpush1.bf16.msra.mxu0 0
      %372 = vmatprep.subr.bf16.mxu0 0
      %373 = vmatpush1.bf16.msra.mxu0 0
      %374 = vmatprep.subr.bf16.mxu0 0
      %375 = vmatpush1.bf16.msra.mxu0 0
      %376 = vmatprep.subr.bf16.mxu0 0
      %377 = vmatpush1.bf16.msra.mxu0 0
      %378 = vmatprep.subr.bf16.mxu0 0
      %379 = vmatpush1.bf16.msra.mxu0 0
      %380 = vmatprep.subr.bf16.mxu0 0
      %381 = vmatpush1.bf16.msra.mxu0 0
      %382 = vmatprep.subr.bf16.mxu0 0
      %383 = vmatpush1.bf16.msra.mxu0 0
      %384 = vmatprep.mubr.bf16.mxu0 0
      %385 = vmatmul.mubr.bf16.gmra.mrb[0].mxu0 %v347
      %v386 = vpop.f32.mrb[0].mxu0
      %v387 = vadd.f32 %v319, %v386
      %v388 = vpop.f32.mrb[0].mxu0
      %v389 = vpop.f32.mrb[0].mxu0
      %v390 = vadd.f32 %v322, %v389
      %v391 = vpop.f32.mrb[0].mxu0
      %392 = vmatprep.mubr.bf16.mxu0 0
      %393 = vmatmul.mubr.bf16.gmra.mrb[0].mxu0 %v350
      %v394 = vpop.f32.mrb[0].mxu0
      %v395 = vadd.f32 %v327, %v394
      %v396 = vpop.f32.mrb[0].mxu0
      %v397 = vpop.f32.mrb[0].mxu0
      %v398 = vpop.f32.mrb[0].mxu0
      %399 = vdwg.mxu0
      %v400 = vld [vmem:[%s245 + $0x8] sm:$0x7]
      %s401 = scalar_lea.vmem %s1, 16
      %v402 = vld [vmem:[%s401] sm:$0xf]
      %v403 = vld [vmem:[%s401 + $0x4] sm:$0xf]
      %v405 = vunpack.c.l.b16 %v400
      %v406 = vpack.c.b16 %v405, %v405
      %vm407 = vsmask.f32 7424
      %v408 = vshrl.u32 %v338, 16
      %v410 = vshll.u32 %v338, 16
      %v412 = vrot.slane %v410, 1
      %v413 = vor.u32 %v408, %v412
      %v415 = vshll.u32 %v406, 16
      %v417 = vrot.slane %v415, 1
      %v418 = vsel %vm407, %v413, %v417
      %v419 = vshrl.u32 %v406, 16
      %v421 = vor.u32 %v419, %v417
      %v424 = vunpack.c.l.b16 %v402
      %v425 = vunpack.c.l.b16 %v403
      %v426 = vpack.c.b16 %v425, %v424
      %v429 = vsel %vm277, %v418, 0
      %v432 = vsel %vm277, %v421, 0
      %434 = vmatprep.subr.bf16.mxu0 0
      %435 = vmatpush1.bf16.msra.mxu0 %v426
      %436 = vmatprep.subr.bf16.mxu0 0
      %437 = vmatpush1.bf16.msra.mxu0 0
      %438 = vmatprep.subr.bf16.mxu0 0
      %439 = vmatpush1.bf16.msra.mxu0 0
      %440 = vmatprep.subr.bf16.mxu0 0
      %441 = vmatpush1.bf16.msra.mxu0 0
      %442 = vmatprep.subr.bf16.mxu0 0
      %443 = vmatpush1.bf16.msra.mxu0 0
      %444 = vmatprep.subr.bf16.mxu0 0
      %445 = vmatpush1.bf16.msra.mxu0 0
      %446 = vmatprep.subr.bf16.mxu0 0
      %447 = vmatpush1.bf16.msra.mxu0 0
      %448 = vmatprep.subr.bf16.mxu0 0
      %449 = vmatpush1.bf16.msra.mxu0 0
      %450 = vmatprep.subr.bf16.mxu0 0
      %451 = vmatpush1.bf16.msra.mxu0 0
      %452 = vmatprep.subr.bf16.mxu0 0
      %453 = vmatpush1.bf16.msra.mxu0 0
      %454 = vmatprep.subr.bf16.mxu0 0
      %455 = vmatpush1.bf16.msra.mxu0 0
      %456 = vmatprep.subr.bf16.mxu0 0
      %457 = vmatpush1.bf16.msra.mxu0 0
      %458 = vmatprep.subr.bf16.mxu0 0
      %459 = vmatpush1.bf16.msra.mxu0 0
      %460 = vmatprep.subr.bf16.mxu0 0
      %461 = vmatpush1.bf16.msra.mxu0 0
      %462 = vmatprep.subr.bf16.mxu0 0
      %463 = vmatpush1.bf16.msra.mxu0 0
      %464 = vmatprep.subr.bf16.mxu0 0
      %465 = vmatpush1.bf16.msra.mxu0 0
      %466 = vmatprep.mubr.bf16.mxu0 0
      %467 = vmatmul.mubr.bf16.gmra.mrb[0].mxu0 %v429
      %v468 = vpop.f32.mrb[0].mxu0
      %v469 = vadd.f32 0.0, %v468
      %v470 = vpop.f32.mrb[0].mxu0
      %v471 = vpop.f32.mrb[0].mxu0
      %v472 = vadd.f32 0.0, %v471
      %v473 = vpop.f32.mrb[0].mxu0
      %474 = vmatprep.mubr.bf16.mxu0 0
      %475 = vmatmul.mubr.bf16.gmra.mrb[0].mxu0 %v432
      %v476 = vpop.f32.mrb[0].mxu0
      %v477 = vadd.f32 0.0, %v476
      %v478 = vpop.f32.mrb[0].mxu0
      %v479 = vpop.f32.mrb[0].mxu0
      %v480 = vpop.f32.mrb[0].mxu0
      %481 = vdwg.mxu0
      %v482 = vadd.f32 %v387, %v469
      %v483 = vadd.f32 %v390, %v472
      %v484 = vadd.f32 %v395, %v477
      %s485 = scalar_lea.vmem %s245, 32
      %v486 = vld [vmem:[%s485] sm:$0xf]
      %v487 = vld [vmem:[%s485 + $0x4] sm:$0xf]
      %v488 = vld [vmem:[%s485 + $0x8] sm:$0x3]
      %s489 = scalar_lea.vmem %s1, 24
      %v490 = vld [vmem:[%s489] sm:$0xf]
      %v491 = vld [vmem:[%s489 + $0x4] sm:$0xf]
      %v495 = vunpack.c.l.b16 %v486
      %v496 = vunpack.c.l.b16 %v487
      %v497 = vunpack.c.l.b16 %v488
      %v498 = vpack.c.b16 %v496, %v495
      %v499 = vpack.c.b16 %v497, %v497
      %v502 = vunpack.c.l.b16 %v490
      %v503 = vunpack.c.l.b16 %v491
      %v504 = vpack.c.b16 %v503, %v502
      %v507 = vsel %vm277, %v498, 0
      %v510 = vsel %vm277, %v499, 0
      %512 = vmatprep.subr.bf16.mxu0 0
      %513 = vmatpush1.bf16.msra.mxu0 %v504
      %514 = vmatprep.subr.bf16.mxu0 0
      %515 = vmatpush1.bf16.msra.mxu0 0
      %516 = vmatprep.subr.bf16.mxu0 0
      %517 = vmatpush1.bf16.msra.mxu0 0
      %518 = vmatprep.subr.bf16.mxu0 0
      %519 = vmatpush1.bf16.msra.mxu0 0
      %520 = vmatprep.subr.bf16.mxu0 0
      %521 = vmatpush1.bf16.msra.mxu0 0
      %522 = vmatprep.subr.bf16.mxu0 0
      %523 = vmatpush1.bf16.msra.mxu0 0
      %524 = vmatprep.subr.bf16.mxu0 0
      %525 = vmatpush1.bf16.msra.mxu0 0
      %526 = vmatprep.subr.bf16.mxu0 0
      %527 = vmatpush1.bf16.msra.mxu0 0
      %528 = vmatprep.subr.bf16.mxu0 0
      %529 = vmatpush1.bf16.msra.mxu0 0
      %530 = vmatprep.subr.bf16.mxu0 0
      %531 = vmatpush1.bf16.msra.mxu0 0
      %532 = vmatprep.subr.bf16.mxu0 0
      %533 = vmatpush1.bf16.msra.mxu0 0
      %534 = vmatprep.subr.bf16.mxu0 0
      %535 = vmatpush1.bf16.msra.mxu0 0
      %536 = vmatprep.subr.bf16.mxu0 0
      %537 = vmatpush1.bf16.msra.mxu0 0
      %538 = vmatprep.subr.bf16.mxu0 0
      %539 = vmatpush1.bf16.msra.mxu0 0
      %540 = vmatprep.subr.bf16.mxu0 0
      %541 = vmatpush1.bf16.msra.mxu0 0
      %542 = vmatprep.subr.bf16.mxu0 0
      %543 = vmatpush1.bf16.msra.mxu0 0
      %544 = vmatprep.mubr.bf16.mxu0 0
      %545 = vmatmul.mubr.bf16.gmra.mrb[0].mxu0 %v507
      %v546 = vpop.f32.mrb[0].mxu0
      %v547 = vadd.f32 0.0, %v546
      %v548 = vpop.f32.mrb[0].mxu0
      %v549 = vpop.f32.mrb[0].mxu0
      %v550 = vadd.f32 0.0, %v549
      %v551 = vpop.f32.mrb[0].mxu0
      %552 = vmatprep.mubr.bf16.mxu0 0
      %553 = vmatmul.mubr.bf16.gmra.mrb[0].mxu0 %v510
      %v554 = vpop.f32.mrb[0].mxu0
      %v555 = vadd.f32 0.0, %v554
      %v556 = vpop.f32.mrb[0].mxu0
      %v557 = vpop.f32.mrb[0].mxu0
      %v558 = vpop.f32.mrb[0].mxu0
      %559 = vdwg.mxu0
      %v560 = vadd.f32 %v482, %v547
      %v561 = vadd.f32 %v483, %v550
      %v562 = vadd.f32 %v484, %v555
      %s563 = scalar_lea.vmem %s245, 48
      %v564 = vld [vmem:[%s563] sm:$0xf]
      %v565 = vld [vmem:[%s563 + $0x4] sm:$0xf]
      %v566 = vld [vmem:[%s563 + $0x8] sm:$0x3]
      %s567 = scalar_lea.vmem %s1, 32
      %v568 = vld [vmem:[%s567] sm:$0xf]
      %v569 = vld [vmem:[%s567 + $0x4] sm:$0xf]
      %v573 = vunpack.c.l.b16 %v564
      %v574 = vunpack.c.l.b16 %v565
      %v575 = vunpack.c.l.b16 %v566
      %v576 = vpack.c.b16 %v574, %v573
      %v577 = vpack.c.b16 %v575, %v575
      %v580 = vunpack.c.l.b16 %v568
      %v581 = vunpack.c.l.b16 %v569
      %v582 = vpack.c.b16 %v581, %v580
      %v585 = vsel %vm277, %v576, 0
      %v588 = vsel %vm277, %v577, 0
      %590 = vmatprep.subr.bf16.mxu0 0
      %591 = vmatpush1.bf16.msra.mxu0 %v582
      %592 = vmatprep.subr.bf16.mxu0 0
      %593 = vmatpush1.bf16.msra.mxu0 0
      %594 = vmatprep.subr.bf16.mxu0 0
      %595 = vmatpush1.bf16.msra.mxu0 0
      %596 = vmatprep.subr.bf16.mxu0 0
      %597 = vmatpush1.bf16.msra.mxu0 0
      %598 = vmatprep.subr.bf16.mxu0 0
      %599 = vmatpush1.bf16.msra.mxu0 0
      %600 = vmatprep.subr.bf16.mxu0 0
      %601 = vmatpush1.bf16.msra.mxu0 0
      %602 = vmatprep.subr.bf16.mxu0 0
      %603 = vmatpush1.bf16.msra.mxu0 0
      %604 = vmatprep.subr.bf16.mxu0 0
      %605 = vmatpush1.bf16.msra.mxu0 0
      %606 = vmatprep.subr.bf16.mxu0 0
      %607 = vmatpush1.bf16.msra.mxu0 0
      %608 = vmatprep.subr.bf16.mxu0 0
      %609 = vmatpush1.bf16.msra.mxu0 0
      %610 = vmatprep.subr.bf16.mxu0 0
      %611 = vmatpush1.bf16.msra.mxu0 0
      %612 = vmatprep.subr.bf16.mxu0 0
      %613 = vmatpush1.bf16.msra.mxu0 0
      %614 = vmatprep.subr.bf16.mxu0 0
      %615 = vmatpush1.bf16.msra.mxu0 0
      %616 = vmatprep.subr.bf16.mxu0 0
      %617 = vmatpush1.bf16.msra.mxu0 0
      %618 = vmatprep.subr.bf16.mxu0 0
      %619 = vmatpush1.bf16.msra.mxu0 0
      %620 = vmatprep.subr.bf16.mxu0 0
      %621 = vmatpush1.bf16.msra.mxu0 0
      %622 = vmatprep.mubr.bf16.mxu0 0
      %623 = vmatmul.mubr.bf16.gmra.mrb[0].mxu0 %v585
      %v624 = vpop.f32.mrb[0].mxu0
      %v625 = vadd.f32 0.0, %v624
      %v626 = vpop.f32.mrb[0].mxu0
      %v627 = vpop.f32.mrb[0].mxu0
      %v628 = vadd.f32 0.0, %v627
      %v629 = vpop.f32.mrb[0].mxu0
      %630 = vmatprep.mubr.bf16.mxu0 0
      %631 = vmatmul.mubr.bf16.gmra.mrb[0].mxu0 %v588
      %v632 = vpop.f32.mrb[0].mxu0
      %v633 = vadd.f32 0.0, %v632
      %v634 = vpop.f32.mrb[0].mxu0
      %v635 = vpop.f32.mrb[0].mxu0
      %v636 = vpop.f32.mrb[0].mxu0
      %637 = vdwg.mxu0
      %v638 = vadd.f32 %v560, %v625
      %v639 = vadd.f32 %v561, %v628
      %v640 = vadd.f32 %v562, %v633
      %v641 = vld [vmem:[%s485 + $0x8] sm:$0x7]
      %s642 = scalar_lea.vmem %s1, 40
      %v643 = vld [vmem:[%s642] sm:$0xf]
      %v644 = vld [vmem:[%s642 + $0x4] sm:$0xf]
      %v646 = vunpack.c.l.b16 %v641
      %v647 = vpack.c.b16 %v646, %v646
      %v648 = vshrl.u32 %v498, 16
      %v650 = vshll.u32 %v498, 16
      %v652 = vrot.slane %v650, 1
      %v653 = vor.u32 %v648, %v652
      %v655 = vshll.u32 %v647, 16
      %v657 = vrot.slane %v655, 1
      %v658 = vsel %vm407, %v653, %v657
      %v659 = vshrl.u32 %v647, 16
      %v661 = vor.u32 %v659, %v657
      %v664 = vunpack.c.l.b16 %v643
      %v665 = vunpack.c.l.b16 %v644
      %v666 = vpack.c.b16 %v665, %v664
      %v669 = vsel %vm277, %v658, 0
      %v672 = vsel %vm277, %v661, 0
      %674 = vmatprep.subr.bf16.mxu0 0
      %675 = vmatpush1.bf16.msra.mxu0 %v666
      %676 = vmatprep.subr.bf16.mxu0 0
      %677 = vmatpush1.bf16.msra.mxu0 0
      %678 = vmatprep.subr.bf16.mxu0 0
      %679 = vmatpush1.bf16.msra.mxu0 0
      %680 = vmatprep.subr.bf16.mxu0 0
      %681 = vmatpush1.bf16.msra.mxu0 0
      %682 = vmatprep.subr.bf16.mxu0 0
      %683 = vmatpush1.bf16.msra.mxu0 0
      %684 = vmatprep.subr.bf16.mxu0 0
      %685 = vmatpush1.bf16.msra.mxu0 0
      %686 = vmatprep.subr.bf16.mxu0 0
      %687 = vmatpush1.bf16.msra.mxu0 0
      %688 = vmatprep.subr.bf16.mxu0 0
      %689 = vmatpush1.bf16.msra.mxu0 0
      %690 = vmatprep.subr.bf16.mxu0 0
      %691 = vmatpush1.bf16.msra.mxu0 0
      %692 = vmatprep.subr.bf16.mxu0 0
      %693 = vmatpush1.bf16.msra.mxu0 0
      %694 = vmatprep.subr.bf16.mxu0 0
      %695 = vmatpush1.bf16.msra.mxu0 0
      %696 = vmatprep.subr.bf16.mxu0 0
      %697 = vmatpush1.bf16.msra.mxu0 0
      %698 = vmatprep.subr.bf16.mxu0 0
      %699 = vmatpush1.bf16.msra.mxu0 0
      %700 = vmatprep.subr.bf16.mxu0 0
      %701 = vmatpush1.bf16.msra.mxu0 0
      %702 = vmatprep.subr.bf16.mxu0 0
      %703 = vmatpush1.bf16.msra.mxu0 0
      %704 = vmatprep.subr.bf16.mxu0 0
      %705 = vmatpush1.bf16.msra.mxu0 0
      %706 = vmatprep.mubr.bf16.mxu0 0
      %707 = vmatmul.mubr.bf16.gmra.mrb[0].mxu0 %v669
      %v708 = vpop.f32.mrb[0].mxu0
      %v709 = vadd.f32 0.0, %v708
      %v710 = vpop.f32.mrb[0].mxu0
      %v711 = vpop.f32.mrb[0].mxu0
      %v712 = vadd.f32 0.0, %v711
      %v713 = vpop.f32.mrb[0].mxu0
      %714 = vmatprep.mubr.bf16.mxu0 0
      %715 = vmatmul.mubr.bf16.gmra.mrb[0].mxu0 %v672
      %v716 = vpop.f32.mrb[0].mxu0
      %v717 = vadd.f32 0.0, %v716
      %v718 = vpop.f32.mrb[0].mxu0
      %v719 = vpop.f32.mrb[0].mxu0
      %v720 = vpop.f32.mrb[0].mxu0
      %721 = vdwg.mxu0
      %v722 = vadd.f32 %v638, %v709
      %v723 = vadd.f32 %v639, %v712
      %v724 = vadd.f32 %v640, %v717
      %v725 = vld [vmem:[%s245] sm:$0xc]
      %v726 = vld [vmem:[%s245 + $0x4] sm:$0xf]
      %v727 = vld [vmem:[%s245 + $0x8] sm:$0xf]
      %v728 = vld [vmem:[%s245 + $0xc] sm:$0x1]
      %s729 = scalar_lea.vmem %s1, 48
      %v730 = vld [vmem:[%s729] sm:$0xf]
      %v731 = vld [vmem:[%s729 + $0x4] sm:$0xf]
      %v736 = vunpack.c.l.b16 %v725
      %v737 = vunpack.c.l.b16 %v726
      %v738 = vunpack.c.l.b16 %v727
      %v739 = vunpack.c.l.b16 %v728
      %v740 = vpack.c.b16 %v737, %v736
      %v741 = vpack.c.b16 %v739, %v738
      %vm742 = vsmask.f32 5376
      %v744 = vshrl.u32 %v740, 16
      %v746 = vrot.slane %v744, 2
      %v747 = vshll.u32 %v740, 16
      %v749 = vrot.slane %v747, 3
      %v750 = vor.u32 %v746, %v749
      %v752 = vshrl.u32 %v741, 16
      %v754 = vrot.slane %v752, 2
      %v755 = vshll.u32 %v741, 16
      %v757 = vrot.slane %v755, 3
      %v758 = vor.u32 %v754, %v757
      %v759 = vsel %vm742, %v750, %v758
      %v762 = vunpack.c.l.b16 %v730
      %v763 = vunpack.c.l.b16 %v731
      %v764 = vpack.c.b16 %v763, %v762
      %v767 = vsel %vm277, %v759, 0
      %v770 = vsel %vm277, %v758, 0
      %772 = vmatprep.subr.bf16.mxu0 0
      %773 = vmatpush1.bf16.msra.mxu0 %v764
      %774 = vmatprep.subr.bf16.mxu0 0
      %775 = vmatpush1.bf16.msra.mxu0 0
      %776 = vmatprep.subr.bf16.mxu0 0
      %777 = vmatpush1.bf16.msra.mxu0 0
      %778 = vmatprep.subr.bf16.mxu0 0
      %779 = vmatpush1.bf16.msra.mxu0 0
      %780 = vmatprep.subr.bf16.mxu0 0
      %781 = vmatpush1.bf16.msra.mxu0 0
      %782 = vmatprep.subr.bf16.mxu0 0
      %783 = vmatpush1.bf16.msra.mxu0 0
      %784 = vmatprep.subr.bf16.mxu0 0
      %785 = vmatpush1.bf16.msra.mxu0 0
      %786 = vmatprep.subr.bf16.mxu0 0
      %787 = vmatpush1.bf16.msra.mxu0 0
      %788 = vmatprep.subr.bf16.mxu0 0
      %789 = vmatpush1.bf16.msra.mxu0 0
      %790 = vmatprep.subr.bf16.mxu0 0
      %791 = vmatpush1.bf16.msra.mxu0 0
      %792 = vmatprep.subr.bf16.mxu0 0
      %793 = vmatpush1.bf16.msra.mxu0 0
      %794 = vmatprep.subr.bf16.mxu0 0
      %795 = vmatpush1.bf16.msra.mxu0 0
      %796 = vmatprep.subr.bf16.mxu0 0
      %797 = vmatpush1.bf16.msra.mxu0 0
      %798 = vmatprep.subr.bf16.mxu0 0
      %799 = vmatpush1.bf16.msra.mxu0 0
      %800 = vmatprep.subr.bf16.mxu0 0
      %801 = vmatpush1.bf16.msra.mxu0 0
      %802 = vmatprep.subr.bf16.mxu0 0
      %803 = vmatpush1.bf16.msra.mxu0 0
      %804 = vmatprep.mubr.bf16.mxu0 0
      %805 = vmatmul.mubr.bf16.gmra.mrb[0].mxu0 %v767
      %v806 = vpop.f32.mrb[0].mxu0
      %v807 = vadd.f32 0.0, %v806
      %v808 = vpop.f32.mrb[0].mxu0
      %v809 = vpop.f32.mrb[0].mxu0
      %v810 = vadd.f32 0.0, %v809
      %v811 = vpop.f32.mrb[0].mxu0
      %812 = vmatprep.mubr.bf16.mxu0 0
      %813 = vmatmul.mubr.bf16.gmra.mrb[0].mxu0 %v770
      %v814 = vpop.f32.mrb[0].mxu0
      %v815 = vadd.f32 0.0, %v814
      %v816 = vpop.f32.mrb[0].mxu0
      %v817 = vpop.f32.mrb[0].mxu0
      %v818 = vpop.f32.mrb[0].mxu0
      %819 = vdwg.mxu0
      %v820 = vadd.f32 %v722, %v807
      %v821 = vadd.f32 %v723, %v810
      %v822 = vadd.f32 %v724, %v815
      %v823 = vld [vmem:[%s256] sm:$0xc]
      %v824 = vld [vmem:[%s256 + $0x4] sm:$0xf]
      %v825 = vld [vmem:[%s256 + $0x8] sm:$0xf]
      %v826 = vld [vmem:[%s256 + $0xc] sm:$0x1]
      %s827 = scalar_lea.vmem %s1, 56
      %v828 = vld [vmem:[%s827] sm:$0xf]
      %v829 = vld [vmem:[%s827 + $0x4] sm:$0xf]
      %v834 = vunpack.c.l.b16 %v823
      %v835 = vunpack.c.l.b16 %v824
      %v836 = vunpack.c.l.b16 %v825
      %v837 = vunpack.c.l.b16 %v826
      %v838 = vpack.c.b16 %v835, %v834
      %v839 = vpack.c.b16 %v837, %v836
      %v841 = vshrl.u32 %v838, 16
      %v843 = vrot.slane %v841, 2
      %v844 = vshll.u32 %v838, 16
      %v846 = vrot.slane %v844, 3
      %v847 = vor.u32 %v843, %v846
      %v849 = vshrl.u32 %v839, 16
      %v851 = vrot.slane %v849, 2
      %v852 = vshll.u32 %v839, 16
      %v854 = vrot.slane %v852, 3
      %v855 = vor.u32 %v851, %v854
      %v856 = vsel %vm742, %v847, %v855
      %v859 = vunpack.c.l.b16 %v828
      %v860 = vunpack.c.l.b16 %v829
      %v861 = vpack.c.b16 %v860, %v859
      %v864 = vsel %vm277, %v856, 0
      %v867 = vsel %vm277, %v855, 0
      %869 = vmatprep.subr.bf16.mxu0 0
      %870 = vmatpush1.bf16.msra.mxu0 %v861
      %871 = vmatprep.subr.bf16.mxu0 0
      %872 = vmatpush1.bf16.msra.mxu0 0
      %873 = vmatprep.subr.bf16.mxu0 0
      %874 = vmatpush1.bf16.msra.mxu0 0
      %875 = vmatprep.subr.bf16.mxu0 0
      %876 = vmatpush1.bf16.msra.mxu0 0
      %877 = vmatprep.subr.bf16.mxu0 0
      %878 = vmatpush1.bf16.msra.mxu0 0
      %879 = vmatprep.subr.bf16.mxu0 0
      %880 = vmatpush1.bf16.msra.mxu0 0
      %881 = vmatprep.subr.bf16.mxu0 0
      %882 = vmatpush1.bf16.msra.mxu0 0
      %883 = vmatprep.subr.bf16.mxu0 0
      %884 = vmatpush1.bf16.msra.mxu0 0
      %885 = vmatprep.subr.bf16.mxu0 0
      %886 = vmatpush1.bf16.msra.mxu0 0
      %887 = vmatprep.subr.bf16.mxu0 0
      %888 = vmatpush1.bf16.msra.mxu0 0
      %889 = vmatprep.subr.bf16.mxu0 0
      %890 = vmatpush1.bf16.msra.mxu0 0
      %891 = vmatprep.subr.bf16.mxu0 0
      %892 = vmatpush1.bf16.msra.mxu0 0
      %893 = vmatprep.subr.bf16.mxu0 0
      %894 = vmatpush1.bf16.msra.mxu0 0
      %895 = vmatprep.subr.bf16.mxu0 0
      %896 = vmatpush1.bf16.msra.mxu0 0
      %897 = vmatprep.subr.bf16.mxu0 0
      %898 = vmatpush1.bf16.msra.mxu0 0
      %899 = vmatprep.subr.bf16.mxu0 0
      %900 = vmatpush1.bf16.msra.mxu0 0
      %901 = vmatprep.mubr.bf16.mxu0 0
      %902 = vmatmul.mubr.bf16.gmra.mrb[0].mxu0 %v864
      %v903 = vpop.f32.mrb[0].mxu0
      %v904 = vadd.f32 0.0, %v903
      %v905 = vpop.f32.mrb[0].mxu0
      %v906 = vpop.f32.mrb[0].mxu0
      %v907 = vadd.f32 0.0, %v906
      %v908 = vpop.f32.mrb[0].mxu0
      %909 = vmatprep.mubr.bf16.mxu0 0
      %910 = vmatmul.mubr.bf16.gmra.mrb[0].mxu0 %v867
      %v911 = vpop.f32.mrb[0].mxu0
      %v912 = vadd.f32 0.0, %v911
      %v913 = vpop.f32.mrb[0].mxu0
      %v914 = vpop.f32.mrb[0].mxu0
      %v915 = vpop.f32.mrb[0].mxu0
      %916 = vdwg.mxu0
      %v917 = vadd.f32 %v820, %v904
      %v918 = vadd.f32 %v821, %v907
      %v919 = vadd.f32 %v822, %v912
      %v920 = vld [vmem:[%s245] sm:$0x8]
      %s921 = scalar_lea.vmem %s1, 64
      %v922 = vld [vmem:[%s921] sm:$0xf]
      %v923 = vld [vmem:[%s921 + $0x4] sm:$0xf]
      %v925 = vunpack.c.l.b16 %v920
      %v926 = vpack.c.b16 %v737, %v925
      %vm927 = vcmask 1044480
      %v928 = vrot.slane %v926, 3
      %v929 = vrot.slane %v741, 3
      %v930 = vsel %vm927, %v928, %v929
      %v933 = vunpack.c.l.b16 %v922
      %v934 = vunpack.c.l.b16 %v923
      %v935 = vpack.c.b16 %v934, %v933
      %v938 = vsel %vm277, %v930, 0
      %v941 = vsel %vm277, %v929, 0
      %943 = vmatprep.subr.bf16.mxu0 0
      %944 = vmatpush1.bf16.msra.mxu0 %v935
      %945 = vmatprep.subr.bf16.mxu0 0
      %946 = vmatpush1.bf16.msra.mxu0 0
      %947 = vmatprep.subr.bf16.mxu0 0
      %948 = vmatpush1.bf16.msra.mxu0 0
      %949 = vmatprep.subr.bf16.mxu0 0
      %950 = vmatpush1.bf16.msra.mxu0 0
      %951 = vmatprep.subr.bf16.mxu0 0
      %952 = vmatpush1.bf16.msra.mxu0 0
      %953 = vmatprep.subr.bf16.mxu0 0
      %954 = vmatpush1.bf16.msra.mxu0 0
      %955 = vmatprep.subr.bf16.mxu0 0
      %956 = vmatpush1.bf16.msra.mxu0 0
      %957 = vmatprep.subr.bf16.mxu0 0
      %958 = vmatpush1.bf16.msra.mxu0 0
      %959 = vmatprep.subr.bf16.mxu0 0
      %960 = vmatpush1.bf16.msra.mxu0 0
      %961 = vmatprep.subr.bf16.mxu0 0
      %962 = vmatpush1.bf16.msra.mxu0 0
      %963 = vmatprep.subr.bf16.mxu0 0
      %964 = vmatpush1.bf16.msra.mxu0 0
      %965 = vmatprep.subr.bf16.mxu0 0
      %966 = vmatpush1.bf16.msra.mxu0 0
      %967 = vmatprep.subr.bf16.mxu0 0
      %968 = vmatpush1.bf16.msra.mxu0 0
      %969 = vmatprep.subr.bf16.mxu0 0
      %970 = vmatpush1.bf16.msra.mxu0 0
      %971 = vmatprep.subr.bf16.mxu0 0
      %972 = vmatpush1.bf16.msra.mxu0 0
      %973 = vmatprep.subr.bf16.mxu0 0
      %974 = vmatpush1.bf16.msra.mxu0 0
      %975 = vmatprep.mubr.bf16.mxu0 0
      %976 = vmatmul.mubr.bf16.gmra.mrb[0].mxu0 %v938
      %v977 = vpop.f32.mrb[0].mxu0
      %v978 = vadd.f32 0.0, %v977
      %v979 = vpop.f32.mrb[0].mxu0
      %v980 = vpop.f32.mrb[0].mxu0
      %v981 = vadd.f32 0.0, %v980
      %v982 = vpop.f32.mrb[0].mxu0
      %983 = vmatprep.mubr.bf16.mxu0 0
      %984 = vmatmul.mubr.bf16.gmra.mrb[0].mxu0 %v941
      %v985 = vpop.f32.mrb[0].mxu0
      %v986 = vadd.f32 0.0, %v985
      %v987 = vpop.f32.mrb[0].mxu0
      %v988 = vpop.f32.mrb[0].mxu0
      %v989 = vpop.f32.mrb[0].mxu0
      %990 = vdwg.mxu0
      %v991 = vadd.f32 %v917, %v978
      %v992 = vadd.f32 %v918, %v981
      %v993 = vadd.f32 %v919, %v986
      %v994 = vld [vmem:[%s2] sm:$0x1]
      %v996 = vlaneseq
      %v997 = vshrl.u32 %v996, 7
      %v998 = vsub.s32 0, %v997
      %v999 = vrot.slane %v994, %v998
      %v1001 = vadd.f32 %v991, %v999
      %v1002 = vadd.f32 %v992, %v999
      %v1003 = vadd.f32 %v993, %v999
      %v1004 = vmax.f32 %v1001, 0.0
      %v1005 = vmax.f32 %v1002, 0.0
      %v1006 = vmax.f32 %v1003, 0.0
      %v1007 = vld [vmem:[%s5] sm:$0xff]
      %v1008 = vld [vmem:[%s5 + $0x8] sm:$0xff]
      %v1009 = vld [vmem:[%s5 + $0x10] sm:$0xf]
      %1011 = vset.pattern.permute.xlu0 0
      %1012 = vperm.xlu0 %1011, %v1007
      %v1013 = vpop.permute.xlu0 %1012
      %1016 = vset.pattern.permute.xlu0 0
      %1017 = vperm.xlu0 %1016, %v1008
      %v1018 = vpop.permute.xlu0 %1017
      %1021 = vset.pattern.permute.xlu0 0
      %1022 = vperm.xlu0 %1021, %v1009
      %v1023 = vpop.permute.xlu0 %1022
      %v1025 = vmul.f32 %v1004, %v1013
      %v1026 = vmul.f32 %v1005, %v1018
      %v1027 = vmul.f32 %v1006, %v1023
      %v1028 = vpack.c.bf16 %v1026, %v1025
      %v1029 = vpack.c.bf16 %v1027, %v1027
      %v1030 = vld [vmem:[%s3] sm:$0xf]
      %v1031 = vld [vmem:[%s3 + $0x4] sm:$0xf]
      %v1032 = vld [vmem:[%s3 + $0x8] sm:$0xf]
      %v1033 = vld [vmem:[%s3 + $0xc] sm:$0xf]
      %v1038 = vunpack.c.l.b16 %v1030
      %v1039 = vunpack.c.l.b16 %v1031
      %v1040 = vunpack.c.l.b16 %v1032
      %v1041 = vunpack.c.l.b16 %v1033
      %v1042 = vpack.c.b16 %v1039, %v1038
      %v1043 = vpack.c.b16 %v1041, %v1040
      %vm1046 = vcmask 261120
      %v1048 = vsel %vm1046, %v1028, 0
      %v1051 = vsel %vm1046, %v1029, 0
      %1053 = vmatprep.subr.bf16.mxu0 0
      %1054 = vmatpush1.bf16.msra.mxu0 %v1042
      %1055 = vmatprep.subr.bf16.mxu0 0
      %1056 = vmatpush1.bf16.msra.mxu0 %v1043
      %1057 = vmatprep.subr.bf16.mxu0 0
      %1058 = vmatpush1.bf16.msra.mxu0 0
      %1059 = vmatprep.subr.bf16.mxu0 0
      %1060 = vmatpush1.bf16.msra.mxu0 0
      %1061 = vmatprep.subr.bf16.mxu0 0
      %1062 = vmatpush1.bf16.msra.mxu0 0
      %1063 = vmatprep.subr.bf16.mxu0 0
      %1064 = vmatpush1.bf16.msra.mxu0 0
      %1065 = vmatprep.subr.bf16.mxu0 0
      %1066 = vmatpush1.bf16.msra.mxu0 0
      %1067 = vmatprep.subr.bf16.mxu0 0
      %1068 = vmatpush1.bf16.msra.mxu0 0
      %1069 = vmatprep.subr.bf16.mxu0 0
      %1070 = vmatpush1.bf16.msra.mxu0 0
      %1071 = vmatprep.subr.bf16.mxu0 0
      %1072 = vmatpush1.bf16.msra.mxu0 0
      %1073 = vmatprep.subr.bf16.mxu0 0
      %1074 = vmatpush1.bf16.msra.mxu0 0
      %1075 = vmatprep.subr.bf16.mxu0 0
      %1076 = vmatpush1.bf16.msra.mxu0 0
      %1077 = vmatprep.subr.bf16.mxu0 0
      %1078 = vmatpush1.bf16.msra.mxu0 0
      %1079 = vmatprep.subr.bf16.mxu0 0
      %1080 = vmatpush1.bf16.msra.mxu0 0
      %1081 = vmatprep.subr.bf16.mxu0 0
      %1082 = vmatpush1.bf16.msra.mxu0 0
      %1083 = vmatprep.subr.bf16.mxu0 0
      %1084 = vmatpush1.bf16.msra.mxu0 0
      %1085 = vmatprep.mubr.bf16.mxu0 0
      %1086 = vmatmul.mubr.bf16.gmra.mrb[0].mxu0 %v1048
      %v1087 = vpop.f32.mrb[0].mxu0
      %v1088 = vadd.f32 0.0, %v1087
      %v1089 = vpop.f32.mrb[0].mxu0
      %v1090 = vpop.f32.mrb[0].mxu0
      %v1091 = vadd.f32 0.0, %v1090
      %v1092 = vpop.f32.mrb[0].mxu0
      %1093 = vmatprep.mubr.bf16.mxu0 0
      %1094 = vmatmul.mubr.bf16.gmra.mrb[0].mxu0 %v1051
      %v1095 = vpop.f32.mrb[0].mxu0
      %v1096 = vadd.f32 0.0, %v1095
      %v1097 = vpop.f32.mrb[0].mxu0
      %v1098 = vpop.f32.mrb[0].mxu0
      %v1099 = vpop.f32.mrb[0].mxu0
      %1100 = vdwg.mxu0
      %v1101 = vadd.f32 %v1088, %v1091
      %vm1102 = vcmask 1043456
      %v1103 = vsel %vm1102, %v1096, 0.0
      %v1104 = vadd.f32 %v1101, %v1103
      %v1105 = vrot.slane %v1104, 4
      %v1106 = vadd.f32 %v1104, %v1105
      %v1107 = vrot.slane %v1106, 2
      %v1108 = vadd.f32 %v1106, %v1107
      %v1109 = vrot.slane %v1108, 1
      %v1110 = vadd.f32 %v1108, %v1109
      %v1111 = vld [vmem:[%s4] sm:$0x1]
      %v1112 = vadd.f32 %v1110, %v1111
      %v1113 = vlaneseq
      %v1114 = vshrl.u32 %v1113, 7
      %v1115 = vsub.s32 0, %v1114
      %v1116 = vrot.slane %v1112, %v1115
      %1117 = vst [vmem:[%s249] sm:$0xff] %v1116
      %p1118 = scmp.lt.s32.totalorder %s17, 1
      %s1119 = scalar_select %p1118, %s17, 1
      %s1120 = smul.addr %s1119, 8
      %s1121 = scalar_lea.vmem %s6, %s1120
      // Predicated region
      $region45: #{a_call__.3} parent=43 // pred_check
        %p1122 = pneg %p166
      $region46: #{a_call__.3} parent=43 // pred_check_branch
        %1124 = sbr.rel (%p1122) target = $region48
      $region47: #{a_call__.3} parent=43 // pred_region
        _
      $region48: #{a_call__.3} parent=43 // pred_fallthru
        _
    $region44: #{a_call__.3} parent=5 // pred_fallthru
      _
    %p1125 = scmp.le.s32.totalorder 2, %s12
    // Predicated region
    $region49: #{a_call__.3} parent=5 // pred_check
      %p1126 = pneg %p1125
    $region50: #{a_call__.3} parent=5 // pred_check_branch
      %1128 = sbr.rel (%p1126) target = $region52
    $region51: #{a_call__.3} parent=5 // pred_region
      %s1129 = ssub.s32 %s12, 2
      // Predicated region
      $region53: #{a_call__.3} parent=51 // pred_check
        %p1130 = pneg %p172
      $region54: #{a_call__.3} parent=51 // pred_check_branch
        %1132 = sbr.rel (%p1130) target = $region56
      $region55: #{a_call__.3} parent=51 // pred_region
        %p1133 = scmp.lt.s32.totalorder %s18, 1
        %s1134 = scalar_select %p1133, %s18, 1
        %s1135 = smul.addr %s1134, 8
        %s1136 = scalar_lea.vmem %s6, %s1135
      $region56: #{a_call__.3} parent=51 // pred_fallthru
        _
    $region52: #{a_call__.3} parent=5 // pred_fallthru
      _
  $region6: #{a_call__.3} parent=0 // loop_footer
    %s16 = sadd.s32 1, %s12
  $region7: #{a_call__.3} parent=0 // loop_footer_branch
    %11 = sbr.rel target = $region3
  $region8: #{a_call__.3} parent=0 // loop_exit
    _

</llo_original>
